<compile_context>
chip_gen: v6e
topology: v6e:2x2x1
jax: 0.10.0
libtpu: 0.0.40
codegen_flags: <defaults>
</compile_context>

<pallas_src>
import numpy as np

import jax
import jax.numpy as jnp
from jax import lax
from jax.experimental import pallas as pl
from jax.experimental.pallas import tpu as pltpu


# ---------------- fused Pallas kernel ----------------

def _make_block_kernel(N, H, W, Cin, Cout, eps):
    """Whole conv_block forward on lane-dense (N*H, W*C) slabs, single invocation."""
    inv_count = 1.0 / float(N * H * W)

    def conv3x3(x, w_ref, sdn, sup):
        # 3x3 SAME conv: the kw taps and the W axis are folded into banded weight
        # matrices (K = W*Cin, N = W*Cout), so each kernel row kh is one MXU matmul.
        # The kh = -1/+1 row offsets (with per-sample zero halos) are applied by the
        # constant shift matrices sdn/sup -- no padded scratch, no offset stores.
        t0 = jnp.dot(x, w_ref[0], preferred_element_type=jnp.float32)   # wants row h-1
        t1 = jnp.dot(x, w_ref[1], preferred_element_type=jnp.float32)   # row h
        t2 = jnp.dot(x, w_ref[2], preferred_element_type=jnp.float32)   # wants row h+1
        return (jnp.dot(sdn, t0, preferred_element_type=jnp.float32) + t1
                + jnp.dot(sup, t2, preferred_element_type=jnp.float32))

    def bn_relu(acc, rmat, g, b):
        # Training-mode BN with in-kernel batch statistics, fully lane-dense.
        # acc @ R sums over the W positions of each channel AND re-broadcasts the
        # totals over W in one MXU op; the sublane sum finishes the (N*H) reduction.
        ch_sum = jnp.sum(jnp.dot(acc, rmat, preferred_element_type=jnp.float32),
                         axis=0, keepdims=True)                        # (1, W*C)
        ch_ssq = jnp.sum(jnp.dot(acc * acc, rmat, preferred_element_type=jnp.float32),
                         axis=0, keepdims=True)                        # (1, W*C)
        mean = ch_sum * inv_count
        var = jnp.maximum(ch_ssq * inv_count - mean * mean, 0.0)       # biased batch var
        scale = g * lax.rsqrt(var + eps)
        shift = b - mean * scale
        return jnp.maximum(acc * scale + shift, 0.0)

    def kernel(x_ref, w1_ref, w2_ref, sdn_ref, sup_ref, r_ref,
               g1_ref, b1_ref, g2_ref, b2_ref, o_ref):
        sdn = sdn_ref[...]
        sup = sup_ref[...]
        rmat = r_ref[...]
        h1 = bn_relu(conv3x3(x_ref[...], w1_ref, sdn, sup),
                     rmat, g1_ref[...], b1_ref[...])
        o_ref[...] = bn_relu(conv3x3(h1, w2_ref, sdn, sup),
                             rmat, g2_ref[...], b2_ref[...])

    return kernel


# ---------------- constant-matrix builders (wrapper side, tiny) ----------------

def _build_banded_weights(w_hwio, W):
    """Wmat[kh, wi*Cin+ci, wo*Cout+co] = w[kh, kw, ci, co] for wi == wo + kw - 1 (valid),
    zero otherwise. Folds the kw taps + SAME padding along W into 3 matmul weights."""
    _, _, Cin, Cout = w_hwio.shape
    wi = np.arange(W)[:, None]
    wo = np.arange(W)[None, :]
    P = np.stack([(wi == wo + (kw - 1)) for kw in range(3)], axis=0).astype(np.float32)
    wm = jnp.einsum("xio,hxcd->hicod", jnp.asarray(P, w_hwio.dtype), w_hwio)
    return wm.reshape(3, W * Cin, W * Cout)


def _shift_matrices(N, H):
    """(N*H, N*H) 0/1 matrices: (S_dn @ t)[r] = t[r-1] and (S_up @ t)[r] = t[r+1],
    zeroed at per-sample boundaries (SAME zero halo along H)."""
    NH = N * H
    r = np.arange(NH)
    sdn = ((r[:, None] - 1 == r[None, :]) & (r[:, None] % H != 0)).astype(np.float32)
    sup = ((r[:, None] + 1 == r[None, :]) & (r[:, None] % H != H - 1)).astype(np.float32)
    return jnp.asarray(sdn), jnp.asarray(sup)


def _channel_sum_matrix(W, C):
    """R[i, j] = 1 iff i % C == j % C: sums a lane-dense (.., W*C) slab over W per channel
    and broadcasts the channel totals back over W, all in one matmul."""
    return jnp.asarray(np.tile(np.eye(C, dtype=np.float32), (W, W)))


# ---------------- forward wrapper ----------------

def conv_block_forward(x_nchw, params, eps=1e-5):
    """Matches conv_block.forward (training-mode BatchNorm, batch statistics)."""
    x = jnp.transpose(x_nchw, (0, 2, 3, 1))               # NCHW -> NHWC (spec is NCHW)
    N, H, W, Cin = x.shape
    Cout = params["w1"].shape[-1]
    NH, WCi, WCo = N * H, W * Cin, W * Cout

    x_lane = x.reshape(NH, WCi)                            # lane-dense, free reshape
    w1 = _build_banded_weights(params["w1"], W)            # (3, W*Cin, W*Cout)
    w2 = _build_banded_weights(params["w2"], W)            # (3, W*Cout, W*Cout)
    sdn, sup = _shift_matrices(N, H)                       # (NH, NH) constants
    rmat = _channel_sum_matrix(W, Cout)                    # (W*Cout, W*Cout) constant
    g1 = jnp.tile(params["g1"], W).reshape(1, WCo)         # lane l = w*Cout + c
    b1 = jnp.tile(params["be1"], W).reshape(1, WCo)
    g2 = jnp.tile(params["g2"], W).reshape(1, WCo)
    b2 = jnp.tile(params["be2"], W).reshape(1, WCo)

    kernel = _make_block_kernel(N, H, W, Cin, Cout, eps)

    out_lane = pl.pallas_call(
        kernel,
        out_shape=jax.ShapeDtypeStruct((NH, WCo), jnp.float32),
        grid_spec=pltpu.PrefetchScalarGridSpec(
            num_scalar_prefetch=0,
            grid=(1,),                                     # single launch; all in VMEM
            in_specs=[
                pl.BlockSpec((NH, WCi), lambda i: (0, 0)),         # x
                pl.BlockSpec((3, WCi, WCo), lambda i: (0, 0, 0)),  # w1 banded
                pl.BlockSpec((3, WCo, WCo), lambda i: (0, 0, 0)),  # w2 banded
                pl.BlockSpec((NH, NH), lambda i: (0, 0)),          # S_dn
                pl.BlockSpec((NH, NH), lambda i: (0, 0)),          # S_up
                pl.BlockSpec((WCo, WCo), lambda i: (0, 0)),        # R
                pl.BlockSpec((1, WCo), lambda i: (0, 0)),          # gamma1 (tiled)
                pl.BlockSpec((1, WCo), lambda i: (0, 0)),          # beta1
                pl.BlockSpec((1, WCo), lambda i: (0, 0)),          # gamma2
                pl.BlockSpec((1, WCo), lambda i: (0, 0)),          # beta2
            ],
            out_specs=pl.BlockSpec((NH, WCo), lambda i: (0, 0)),   # lane-dense output
        ),
        compiler_params=pltpu.CompilerParams(
            dimension_semantics=("arbitrary",)),
    )(x_lane, w1, w2, sdn, sup, rmat, g1, b1, g2, b2)

    out = out_lane.reshape(N, H, W, Cout)                  # metadata-only reshape
    return jnp.transpose(out, (0, 3, 1, 2))                # NHWC -> NCHW


# ---------------- reference (pure JAX) for sanity check ----------------

def _ref_conv_bn_relu(x_nhwc, w, b, gamma, beta, eps=1e-5):
    y = lax.conv_general_dilated(
        x_nhwc, w, window_strides=(1, 1), padding="SAME",
        dimension_numbers=("NHWC", "HWIO", "NHWC")) + b
    mean = jnp.mean(y, axis=(0, 1, 2))
    var = jnp.mean((y - mean) ** 2, axis=(0, 1, 2))
    yhat = (y - mean) * lax.rsqrt(var + eps) * gamma + beta
    return jnp.maximum(yhat, 0.0)


def _ref_forward(x_nchw, p):
    x = jnp.transpose(x_nchw, (0, 2, 3, 1))
    h = _ref_conv_bn_relu(x, p["w1"], p["b1"], p["g1"], p["be1"])
    h = _ref_conv_bn_relu(h, p["w2"], p["b2"], p["g2"], p["be2"])
    return jnp.transpose(h, (0, 3, 1, 2))


# ---------------- main ----------------

if __name__ == "__main__":
    key = jax.random.PRNGKey(0)
    N, Cin, Cout, H, W = 2, 4, 8, 16, 16

    ks = jax.random.split(key, 9)
    x = jax.random.normal(ks[0], (N, Cin, H, W), jnp.float32)        # NCHW like PyTorch

    # Parameters (shapes per nn.Conv2d / nn.BatchNorm2d). Conv weights stored HWIO.
    # b1/b2 feed only the reference: training-mode BN cancels the conv bias exactly,
    # so the Pallas path drops the bias add entirely.
    params = {
        "w1": 0.1 * jax.random.normal(ks[1], (3, 3, Cin, Cout), jnp.float32),
        "b1": 0.1 * jax.random.normal(ks[2], (Cout,), jnp.float32),
        "g1": 1.0 + 0.1 * jax.random.normal(ks[3], (Cout,), jnp.float32),
        "be1": 0.1 * jax.random.normal(ks[4], (Cout,), jnp.float32),
        "w2": 0.1 * jax.random.normal(ks[5], (3, 3, Cout, Cout), jnp.float32),
        "b2": 0.1 * jax.random.normal(ks[6], (Cout,), jnp.float32),
        "g2": 1.0 + 0.1 * jax.random.normal(ks[7], (Cout,), jnp.float32),
        "be2": 0.1 * jax.random.normal(ks[8], (Cout,), jnp.float32),
    }

    fwd = jax.jit(conv_block_forward)
    out = jax.block_until_ready(fwd(x, params))
    ref = jax.block_until_ready(_ref_forward(x, params))

    assert out.shape == (N, Cout, H, W), out.shape
    max_err = float(jnp.max(jnp.abs(out - ref)))
    assert jnp.allclose(out, ref, atol=1e-3, rtol=1e-3), max_err
    print("KERNEL_OK")
</pallas_src>

<mosaic_0001>
module attributes {stable_mosaic.version = 11 : i64} {
  func.func @kernel(%arg0: i32, %arg1: memref<32x64xf32, #tpu.memory_space<vmem>>, %arg2: memref<3x64x128xf32, #tpu.memory_space<vmem>>, %arg3: memref<3x128x128xf32, #tpu.memory_space<vmem>>, %arg4: memref<32x32xf32, #tpu.memory_space<vmem>>, %arg5: memref<32x32xf32, #tpu.memory_space<vmem>>, %arg6: memref<128x128xf32, #tpu.memory_space<vmem>>, %arg7: memref<1x128xf32, #tpu.memory_space<vmem>>, %arg8: memref<1x128xf32, #tpu.memory_space<vmem>>, %arg9: memref<1x128xf32, #tpu.memory_space<vmem>>, %arg10: memref<1x128xf32, #tpu.memory_space<vmem>>, %arg11: memref<32x128xf32, #tpu.memory_space<vmem>>) attributes {dimension_semantics = [#tpu.dimension_semantics<arbitrary>], iteration_bounds = array<i64: 1>, scalar_prefetch = 0 : i64, scratch_operands = 0 : i64, tpu.core_type = #tpu.core_type<tc>, window_params = [{pipeline_mode = #tpu.pipeline_mode<synchronous>, transform_indices = @transform_0, window_bounds = array<i64: 32, 64>}, {pipeline_mode = #tpu.pipeline_mode<synchronous>, transform_indices = @transform_1, window_bounds = array<i64: 3, 64, 128>}, {pipeline_mode = #tpu.pipeline_mode<synchronous>, transform_indices = @transform_2, window_bounds = array<i64: 3, 128, 128>}, {pipeline_mode = #tpu.pipeline_mode<synchronous>, transform_indices = @transform_3, window_bounds = array<i64: 32, 32>}, {pipeline_mode = #tpu.pipeline_mode<synchronous>, transform_indices = @transform_4, window_bounds = array<i64: 32, 32>}, {pipeline_mode = #tpu.pipeline_mode<synchronous>, transform_indices = @transform_5, window_bounds = array<i64: 128, 128>}, {pipeline_mode = #tpu.pipeline_mode<synchronous>, transform_indices = @transform_6, window_bounds = array<i64: 1, 128>}, {pipeline_mode = #tpu.pipeline_mode<synchronous>, transform_indices = @transform_7, window_bounds = array<i64: 1, 128>}, {pipeline_mode = #tpu.pipeline_mode<synchronous>, transform_indices = @transform_8, window_bounds = array<i64: 1, 128>}, {pipeline_mode = #tpu.pipeline_mode<synchronous>, transform_indices = @transform_9, window_bounds = array<i64: 1, 128>}, {pipeline_mode = #tpu.pipeline_mode<synchronous>, transform_indices = @transform_10, window_bounds = array<i64: 32, 128>}]} {
    %c0 = arith.constant 0 : index
    %c0_0 = arith.constant 0 : index
    %0 = vector.load %arg4[%c0, %c0_0] : memref<32x32xf32, #tpu.memory_space<vmem>>, vector<32x32xf32>
    %c0_1 = arith.constant 0 : index
    %c0_2 = arith.constant 0 : index
    %1 = vector.load %arg5[%c0_1, %c0_2] : memref<32x32xf32, #tpu.memory_space<vmem>>, vector<32x32xf32>
    %c0_3 = arith.constant 0 : index
    %c0_4 = arith.constant 0 : index
    %2 = vector.load %arg6[%c0_3, %c0_4] : memref<128x128xf32, #tpu.memory_space<vmem>>, vector<128x128xf32>
    %c0_5 = arith.constant 0 : index
    %c0_6 = arith.constant 0 : index
    %3 = vector.load %arg1[%c0_5, %c0_6] : memref<32x64xf32, #tpu.memory_space<vmem>>, vector<32x64xf32>
    %c0_7 = arith.constant 0 : index
    %c0_8 = arith.constant 0 : index
    %c0_9 = arith.constant 0 : index
    %4 = vector.load %arg2[%c0_7, %c0_8, %c0_9] : memref<3x64x128xf32, #tpu.memory_space<vmem>>, vector<1x64x128xf32>
    %5 = vector.shape_cast %4 : vector<1x64x128xf32> to vector<64x128xf32>
    %cst = arith.constant dense<0.000000e+00> : vector<32x128xf32>
    %6 = tpu.matmul %3, %5, %cst {dimension_numbers = #tpu.dot_dimension_numbers<[1], [0], [0], [1], [0, 0, 1, 1], [], []>} : vector<32x64xf32>, vector<64x128xf32>, vector<32x128xf32> -> vector<32x128xf32>
    %c1 = arith.constant 1 : index
    %c0_10 = arith.constant 0 : index
    %c0_11 = arith.constant 0 : index
    %7 = vector.load %arg2[%c1, %c0_10, %c0_11] : memref<3x64x128xf32, #tpu.memory_space<vmem>>, vector<1x64x128xf32>
    %8 = vector.shape_cast %7 : vector<1x64x128xf32> to vector<64x128xf32>
    %cst_12 = arith.constant dense<0.000000e+00> : vector<32x128xf32>
    %9 = tpu.matmul %3, %8, %cst_12 {dimension_numbers = #tpu.dot_dimension_numbers<[1], [0], [0], [1], [0, 0, 1, 1], [], []>} : vector<32x64xf32>, vector<64x128xf32>, vector<32x128xf32> -> vector<32x128xf32>
    %c2 = arith.constant 2 : index
    %c0_13 = arith.constant 0 : index
    %c0_14 = arith.constant 0 : index
    %10 = vector.load %arg2[%c2, %c0_13, %c0_14] : memref<3x64x128xf32, #tpu.memory_space<vmem>>, vector<1x64x128xf32>
    %11 = vector.shape_cast %10 : vector<1x64x128xf32> to vector<64x128xf32>
    %cst_15 = arith.constant dense<0.000000e+00> : vector<32x128xf32>
    %12 = tpu.matmul %3, %11, %cst_15 {dimension_numbers = #tpu.dot_dimension_numbers<[1], [0], [0], [1], [0, 0, 1, 1], [], []>} : vector<32x64xf32>, vector<64x128xf32>, vector<32x128xf32> -> vector<32x128xf32>
    %cst_16 = arith.constant dense<0.000000e+00> : vector<32x128xf32>
    %13 = tpu.matmul %0, %6, %cst_16 {dimension_numbers = #tpu.dot_dimension_numbers<[1], [0], [0], [1], [0, 0, 1, 1], [], []>} : vector<32x32xf32>, vector<32x128xf32>, vector<32x128xf32> -> vector<32x128xf32>
    %14 = arith.addf %13, %9 : vector<32x128xf32>
    %cst_17 = arith.constant dense<0.000000e+00> : vector<32x128xf32>
    %15 = tpu.matmul %1, %12, %cst_17 {dimension_numbers = #tpu.dot_dimension_numbers<[1], [0], [0], [1], [0, 0, 1, 1], [], []>} : vector<32x32xf32>, vector<32x128xf32>, vector<32x128xf32> -> vector<32x128xf32>
    %16 = arith.addf %14, %15 : vector<32x128xf32>
    %c0_18 = arith.constant 0 : index
    %c0_19 = arith.constant 0 : index
    %17 = vector.load %arg7[%c0_18, %c0_19] : memref<1x128xf32, #tpu.memory_space<vmem>>, vector<1x128xf32>
    %c0_20 = arith.constant 0 : index
    %c0_21 = arith.constant 0 : index
    %18 = vector.load %arg8[%c0_20, %c0_21] : memref<1x128xf32, #tpu.memory_space<vmem>>, vector<1x128xf32>
    %cst_22 = arith.constant dense<0.000000e+00> : vector<32x128xf32>
    %19 = tpu.matmul %16, %2, %cst_22 {dimension_numbers = #tpu.dot_dimension_numbers<[1], [0], [0], [1], [0, 0, 1, 1], [], []>} : vector<32x128xf32>, vector<128x128xf32>, vector<32x128xf32> -> vector<32x128xf32>
    %cst_23 = arith.constant dense<0.000000e+00> : vector<128xf32>
    %20 = vector.multi_reduction <add>, %19, %cst_23 [0] : vector<32x128xf32> to vector<128xf32>
    %21 = vector.shape_cast %20 : vector<128xf32> to vector<1x128xf32>
    %22 = arith.mulf %16, %16 : vector<32x128xf32>
    %cst_24 = arith.constant dense<0.000000e+00> : vector<32x128xf32>
    %23 = tpu.matmul %22, %2, %cst_24 {dimension_numbers = #tpu.dot_dimension_numbers<[1], [0], [0], [1], [0, 0, 1, 1], [], []>} : vector<32x128xf32>, vector<128x128xf32>, vector<32x128xf32> -> vector<32x128xf32>
    %cst_25 = arith.constant dense<0.000000e+00> : vector<128xf32>
    %24 = vector.multi_reduction <add>, %23, %cst_25 [0] : vector<32x128xf32> to vector<128xf32>
    %25 = vector.shape_cast %24 : vector<128xf32> to vector<1x128xf32>
    %cst_26 = arith.constant 0.001953125 : f32
    %26 = vector.broadcast %cst_26 : f32 to vector<1x128xf32>
    %27 = arith.mulf %21, %26 : vector<1x128xf32>
    %cst_27 = arith.constant 0.001953125 : f32
    %28 = vector.broadcast %cst_27 : f32 to vector<1x128xf32>
    %29 = arith.mulf %25, %28 : vector<1x128xf32>
    %30 = arith.mulf %27, %27 : vector<1x128xf32>
    %31 = arith.subf %29, %30 : vector<1x128xf32>
    %cst_28 = arith.constant 0.000000e+00 : f32
    %32 = vector.broadcast %cst_28 : f32 to vector<1x128xf32>
    %33 = arith.maximumf %31, %32 : vector<1x128xf32>
    %cst_29 = arith.constant 9.99999974E-6 : f32
    %34 = vector.broadcast %cst_29 : f32 to vector<1x128xf32>
    %35 = arith.addf %33, %34 : vector<1x128xf32>
    %36 = math.rsqrt %35 : vector<1x128xf32>
    %37 = arith.mulf %17, %36 : vector<1x128xf32>
    %38 = arith.mulf %27, %37 : vector<1x128xf32>
    %39 = arith.subf %18, %38 : vector<1x128xf32>
    %40 = vector.broadcast %37 : vector<1x128xf32> to vector<32x128xf32>
    %41 = arith.mulf %16, %40 : vector<32x128xf32>
    %42 = vector.broadcast %39 : vector<1x128xf32> to vector<32x128xf32>
    %43 = arith.addf %41, %42 : vector<32x128xf32>
    %cst_30 = arith.constant 0.000000e+00 : f32
    %44 = vector.broadcast %cst_30 : f32 to vector<32x128xf32>
    %45 = arith.maximumf %43, %44 : vector<32x128xf32>
    %c0_31 = arith.constant 0 : index
    %c0_32 = arith.constant 0 : index
    %c0_33 = arith.constant 0 : index
    %46 = vector.load %arg3[%c0_31, %c0_32, %c0_33] : memref<3x128x128xf32, #tpu.memory_space<vmem>>, vector<1x128x128xf32>
    %47 = vector.shape_cast %46 : vector<1x128x128xf32> to vector<128x128xf32>
    %cst_34 = arith.constant dense<0.000000e+00> : vector<32x128xf32>
    %48 = tpu.matmul %45, %47, %cst_34 {dimension_numbers = #tpu.dot_dimension_numbers<[1], [0], [0], [1], [0, 0, 1, 1], [], []>} : vector<32x128xf32>, vector<128x128xf32>, vector<32x128xf32> -> vector<32x128xf32>
    %c1_35 = arith.constant 1 : index
    %c0_36 = arith.constant 0 : index
    %c0_37 = arith.constant 0 : index
    %49 = vector.load %arg3[%c1_35, %c0_36, %c0_37] : memref<3x128x128xf32, #tpu.memory_space<vmem>>, vector<1x128x128xf32>
    %50 = vector.shape_cast %49 : vector<1x128x128xf32> to vector<128x128xf32>
    %cst_38 = arith.constant dense<0.000000e+00> : vector<32x128xf32>
    %51 = tpu.matmul %45, %50, %cst_38 {dimension_numbers = #tpu.dot_dimension_numbers<[1], [0], [0], [1], [0, 0, 1, 1], [], []>} : vector<32x128xf32>, vector<128x128xf32>, vector<32x128xf32> -> vector<32x128xf32>
    %c2_39 = arith.constant 2 : index
    %c0_40 = arith.constant 0 : index
    %c0_41 = arith.constant 0 : index
    %52 = vector.load %arg3[%c2_39, %c0_40, %c0_41] : memref<3x128x128xf32, #tpu.memory_space<vmem>>, vector<1x128x128xf32>
    %53 = vector.shape_cast %52 : vector<1x128x128xf32> to vector<128x128xf32>
    %cst_42 = arith.constant dense<0.000000e+00> : vector<32x128xf32>
    %54 = tpu.matmul %45, %53, %cst_42 {dimension_numbers = #tpu.dot_dimension_numbers<[1], [0], [0], [1], [0, 0, 1, 1], [], []>} : vector<32x128xf32>, vector<128x128xf32>, vector<32x128xf32> -> vector<32x128xf32>
    %cst_43 = arith.constant dense<0.000000e+00> : vector<32x128xf32>
    %55 = tpu.matmul %0, %48, %cst_43 {dimension_numbers = #tpu.dot_dimension_numbers<[1], [0], [0], [1], [0, 0, 1, 1], [], []>} : vector<32x32xf32>, vector<32x128xf32>, vector<32x128xf32> -> vector<32x128xf32>
    %56 = arith.addf %55, %51 : vector<32x128xf32>
    %cst_44 = arith.constant dense<0.000000e+00> : vector<32x128xf32>
    %57 = tpu.matmul %1, %54, %cst_44 {dimension_numbers = #tpu.dot_dimension_numbers<[1], [0], [0], [1], [0, 0, 1, 1], [], []>} : vector<32x32xf32>, vector<32x128xf32>, vector<32x128xf32> -> vector<32x128xf32>
    %58 = arith.addf %56, %57 : vector<32x128xf32>
    %c0_45 = arith.constant 0 : index
    %c0_46 = arith.constant 0 : index
    %59 = vector.load %arg9[%c0_45, %c0_46] : memref<1x128xf32, #tpu.memory_space<vmem>>, vector<1x128xf32>
    %c0_47 = arith.constant 0 : index
    %c0_48 = arith.constant 0 : index
    %60 = vector.load %arg10[%c0_47, %c0_48] : memref<1x128xf32, #tpu.memory_space<vmem>>, vector<1x128xf32>
    %cst_49 = arith.constant dense<0.000000e+00> : vector<32x128xf32>
    %61 = tpu.matmul %58, %2, %cst_49 {dimension_numbers = #tpu.dot_dimension_numbers<[1], [0], [0], [1], [0, 0, 1, 1], [], []>} : vector<32x128xf32>, vector<128x128xf32>, vector<32x128xf32> -> vector<32x128xf32>
    %cst_50 = arith.constant dense<0.000000e+00> : vector<128xf32>
    %62 = vector.multi_reduction <add>, %61, %cst_50 [0] : vector<32x128xf32> to vector<128xf32>
    %63 = vector.shape_cast %62 : vector<128xf32> to vector<1x128xf32>
    %64 = arith.mulf %58, %58 : vector<32x128xf32>
    %cst_51 = arith.constant dense<0.000000e+00> : vector<32x128xf32>
    %65 = tpu.matmul %64, %2, %cst_51 {dimension_numbers = #tpu.dot_dimension_numbers<[1], [0], [0], [1], [0, 0, 1, 1], [], []>} : vector<32x128xf32>, vector<128x128xf32>, vector<32x128xf32> -> vector<32x128xf32>
    %cst_52 = arith.constant dense<0.000000e+00> : vector<128xf32>
    %66 = vector.multi_reduction <add>, %65, %cst_52 [0] : vector<32x128xf32> to vector<128xf32>
    %67 = vector.shape_cast %66 : vector<128xf32> to vector<1x128xf32>
    %cst_53 = arith.constant 0.001953125 : f32
    %68 = vector.broadcast %cst_53 : f32 to vector<1x128xf32>
    %69 = arith.mulf %63, %68 : vector<1x128xf32>
    %cst_54 = arith.constant 0.001953125 : f32
    %70 = vector.broadcast %cst_54 : f32 to vector<1x128xf32>
    %71 = arith.mulf %67, %70 : vector<1x128xf32>
    %72 = arith.mulf %69, %69 : vector<1x128xf32>
    %73 = arith.subf %71, %72 : vector<1x128xf32>
    %cst_55 = arith.constant 0.000000e+00 : f32
    %74 = vector.broadcast %cst_55 : f32 to vector<1x128xf32>
    %75 = arith.maximumf %73, %74 : vector<1x128xf32>
    %cst_56 = arith.constant 9.99999974E-6 : f32
    %76 = vector.broadcast %cst_56 : f32 to vector<1x128xf32>
    %77 = arith.addf %75, %76 : vector<1x128xf32>
    %78 = math.rsqrt %77 : vector<1x128xf32>
    %79 = arith.mulf %59, %78 : vector<1x128xf32>
    %80 = arith.mulf %69, %79 : vector<1x128xf32>
    %81 = arith.subf %60, %80 : vector<1x128xf32>
    %82 = vector.broadcast %79 : vector<1x128xf32> to vector<32x128xf32>
    %83 = arith.mulf %58, %82 : vector<32x128xf32>
    %84 = vector.broadcast %81 : vector<1x128xf32> to vector<32x128xf32>
    %85 = arith.addf %83, %84 : vector<32x128xf32>
    %cst_57 = arith.constant 0.000000e+00 : f32
    %86 = vector.broadcast %cst_57 : f32 to vector<32x128xf32>
    %87 = arith.maximumf %85, %86 : vector<32x128xf32>
    %c0_58 = arith.constant 0 : index
    %c0_59 = arith.constant 0 : index
    %88 = vector.load %arg11[%c0_58, %c0_59] : memref<32x128xf32, #tpu.memory_space<vmem>>, vector<32x128xf32>
    tpu.vector_store %arg11[%c0_58, %c0_59], %87 {strides = array<i32>} : memref<32x128xf32, #tpu.memory_space<vmem>>, vector<32x128xf32>,
    return
  }
  func.func @transform_0(%arg0: i32) -> (i32, i32) {
    %c0_i32 = arith.constant 0 : i32
    %c0_i32_0 = arith.constant 0 : i32
    %c0_i32_1 = arith.constant 0 : i32
    return %c0_i32, %c0_i32_0 : i32, i32
  }
  func.func @transform_1(%arg0: i32) -> (i32, i32, i32) {
    %c0_i32 = arith.constant 0 : i32
    %c0_i32_0 = arith.constant 0 : i32
    %c0_i32_1 = arith.constant 0 : i32
    %c0_i32_2 = arith.constant 0 : i32
    return %c0_i32, %c0_i32_0, %c0_i32_1 : i32, i32, i32
  }
  func.func @transform_2(%arg0: i32) -> (i32, i32, i32) {
    %c0_i32 = arith.constant 0 : i32
    %c0_i32_0 = arith.constant 0 : i32
    %c0_i32_1 = arith.constant 0 : i32
    %c0_i32_2 = arith.constant 0 : i32
    return %c0_i32, %c0_i32_0, %c0_i32_1 : i32, i32, i32
  }
  func.func @transform_3(%arg0: i32) -> (i32, i32) {
    %c0_i32 = arith.constant 0 : i32
    %c0_i32_0 = arith.constant 0 : i32
    %c0_i32_1 = arith.constant 0 : i32
    return %c0_i32, %c0_i32_0 : i32, i32
  }
  func.func @transform_4(%arg0: i32) -> (i32, i32) {
    %c0_i32 = arith.constant 0 : i32
    %c0_i32_0 = arith.constant 0 : i32
    %c0_i32_1 = arith.constant 0 : i32
    return %c0_i32, %c0_i32_0 : i32, i32
  }
  func.func @transform_5(%arg0: i32) -> (i32, i32) {
    %c0_i32 = arith.constant 0 : i32
    %c0_i32_0 = arith.constant 0 : i32
    %c0_i32_1 = arith.constant 0 : i32
    return %c0_i32, %c0_i32_0 : i32, i32
  }
  func.func @transform_6(%arg0: i32) -> (i32, i32) {
    %c0_i32 = arith.constant 0 : i32
    %c0_i32_0 = arith.constant 0 : i32
    %c0_i32_1 = arith.constant 0 : i32
    return %c0_i32, %c0_i32_0 : i32, i32
  }
  func.func @transform_7(%arg0: i32) -> (i32, i32) {
    %c0_i32 = arith.constant 0 : i32
    %c0_i32_0 = arith.constant 0 : i32
    %c0_i32_1 = arith.constant 0 : i32
    return %c0_i32, %c0_i32_0 : i32, i32
  }
  func.func @transform_8(%arg0: i32) -> (i32, i32) {
    %c0_i32 = arith.constant 0 : i32
    %c0_i32_0 = arith.constant 0 : i32
    %c0_i32_1 = arith.constant 0 : i32
    return %c0_i32, %c0_i32_0 : i32, i32
  }
  func.func @transform_9(%arg0: i32) -> (i32, i32) {
    %c0_i32 = arith.constant 0 : i32
    %c0_i32_0 = arith.constant 0 : i32
    %c0_i32_1 = arith.constant 0 : i32
    return %c0_i32, %c0_i32_0 : i32, i32
  }
  func.func @transform_10(%arg0: i32) -> (i32, i32) {
    %c0_i32 = arith.constant 0 : i32
    %c0_i32_0 = arith.constant 0 : i32
    %c0_i32_1 = arith.constant 0 : i32
    return %c0_i32, %c0_i32_0 : i32, i32
  }
}

</mosaic_0001>

<llo_original>
// kernel: tile.23
$region0: #{tile.23}
  #allocation0 [shape = 's32[1]{0}', space=sflag, size = 0x4, scoped, tag = 'scoped memory for tile.23']
  %s0 = inlined_call_operand.vmem [shape: f32[8], index: 0, kind: input, shape index: {}]
  %s1 = inlined_call_operand.vmem [shape: f32[16,8], index: 1, kind: output, shape index: {}]
  // Predicated region
  $region2: #{tile.23} parent=0 // pred_check
    _
  $region3: #{tile.23} parent=0 // pred_check_branch
    %3 = sbr.rel (0) target = $region5
  $region4: #{tile.23} parent=0 // pred_region
    _
  $region5: #{tile.23} parent=0 // pred_fallthru
    _
  %v4 = vld [vmem:[%s0] ss:$0 sm:$0xff]
  %5 = vst [vmem:[%s1] sm:$0xff] %v4
  %s6 = scalar_lea.vmem %s1, 8
  %7 = vst [vmem:[%s6] sm:$0xff] %v4

// kernel: tile.24
$region0: #{tile.24}
  %s0 = inlined_call_operand.vmem [shape: f32[16,8], index: 0, kind: input, shape index: {}]
  %s1 = inlined_call_operand.vmem [shape: f32[1,128], index: 1, kind: output, shape index: {}]
  $region1: #{tile.24} parent=0
    #allocation0 [shape = 'u8[4096]{0}', space=vmem, size = 0x1000, scoped, tag = 'scoped mem for output reshape']
    %v2 = vld [vmem:[%s0] sm:$0x1]
    %vm3 = vcmask 64512
    %4 = vst.msk [vmem:[#allocation0] sm:$0x1] %vm3, %v2
    %s5 = scalar_lea.vmem %s0, 15
    %v6 = vld [vmem:[%s5] sm:$0x1]
    %7 = vrot.lane.b32.xlu0 %v6, 120
    %v8 = vpop.permute.xlu0 %7
    %vm9 = vcmask 1048512
    %10 = vst.msk [vmem:[#allocation0] sm:$0x1] %vm9, %v8
    %s11 = scalar_lea.vmem %s0, 14
    %v12 = vld [vmem:[%s11] sm:$0x1]
    %13 = vrot.lane.b32.xlu0 %v12, 112
    %v14 = vpop.permute.xlu0 %13
    %vm15 = vcmask 982912
    %16 = vst.msk [vmem:[#allocation0] sm:$0x1] %vm15, %v14
    %s17 = scalar_lea.vmem %s0, 13
    %v18 = vld [vmem:[%s17] sm:$0x1]
    %19 = vrot.lane.b32.xlu0 %v18, 104
    %v20 = vpop.permute.xlu0 %19
    %vm21 = vcmask 917312
    %22 = vst.msk [vmem:[#allocation0] sm:$0x1] %vm21, %v20
    %s23 = scalar_lea.vmem %s0, 12
    %v24 = vld [vmem:[%s23] sm:$0x1]
    %25 = vrot.lane.b32.xlu0 %v24, 96
    %v26 = vpop.permute.xlu0 %25
    %vm27 = vcmask 851712
    %28 = vst.msk [vmem:[#allocation0] sm:$0x1] %vm27, %v26
    %s29 = scalar_lea.vmem %s0, 11
    %v30 = vld [vmem:[%s29] sm:$0x1]
    %31 = vrot.lane.b32.xlu0 %v30, 88
    %v32 = vpop.permute.xlu0 %31
    %vm33 = vcmask 786112
    %34 = vst.msk [vmem:[#allocation0] sm:$0x1] %vm33, %v32
    %s35 = scalar_lea.vmem %s0, 10
    %v36 = vld [vmem:[%s35] sm:$0x1]
    %37 = vrot.lane.b32.xlu0 %v36, 80
    %v38 = vpop.permute.xlu0 %37
    %vm39 = vcmask 720512
    %40 = vst.msk [vmem:[#allocation0] sm:$0x1] %vm39, %v38
    %s41 = scalar_lea.vmem %s0, 9
    %v42 = vld [vmem:[%s41] sm:$0x1]
    %43 = vrot.lane.b32.xlu0 %v42, 72
    %v44 = vpop.permute.xlu0 %43
    %vm45 = vcmask 654912
    %46 = vst.msk [vmem:[#allocation0] sm:$0x1] %vm45, %v44
    %s47 = scalar_lea.vmem %s0, 8
    %v48 = vld [vmem:[%s47] sm:$0x1]
    %49 = vrot.lane.b32.xlu0 %v48, 64
    %v50 = vpop.permute.xlu0 %49
    %vm51 = vcmask 589312
    %52 = vst.msk [vmem:[#allocation0] sm:$0x1] %vm51, %v50
    %s53 = scalar_lea.vmem %s0, 7
    %v54 = vld [vmem:[%s53] sm:$0x1]
    %55 = vrot.lane.b32.xlu0 %v54, 56
    %v56 = vpop.permute.xlu0 %55
    %vm57 = vcmask 523712
    %58 = vst.msk [vmem:[#allocation0] sm:$0x1] %vm57, %v56
    %s59 = scalar_lea.vmem %s0, 6
    %v60 = vld [vmem:[%s59] sm:$0x1]
    %61 = vrot.lane.b32.xlu0 %v60, 48
    %v62 = vpop.permute.xlu0 %61
    %vm63 = vcmask 458112
    %64 = vst.msk [vmem:[#allocation0] sm:$0x1] %vm63, %v62
    %s65 = scalar_lea.vmem %s0, 5
    %v66 = vld [vmem:[%s65] sm:$0x1]
    %67 = vrot.lane.b32.xlu0 %v66, 40
    %v68 = vpop.permute.xlu0 %67
    %vm69 = vcmask 392512
    %70 = vst.msk [vmem:[#allocation0] sm:$0x1] %vm69, %v68
    %s71 = scalar_lea.vmem %s0, 4
    %v72 = vld [vmem:[%s71] sm:$0x1]
    %73 = vrot.lane.b32.xlu0 %v72, 32
    %v74 = vpop.permute.xlu0 %73
    %vm75 = vcmask 326912
    %76 = vst.msk [vmem:[#allocation0] sm:$0x1] %vm75, %v74
    %s77 = scalar_lea.vmem %s0, 3
    %v78 = vld [vmem:[%s77] sm:$0x1]
    %79 = vrot.lane.b32.xlu0 %v78, 24
    %v80 = vpop.permute.xlu0 %79
    %vm81 = vcmask 261312
    %82 = vst.msk [vmem:[#allocation0] sm:$0x1] %vm81, %v80
    %s83 = scalar_lea.vmem %s0, 2
    %v84 = vld [vmem:[%s83] sm:$0x1]
    %85 = vrot.lane.b32.xlu0 %v84, 16
    %v86 = vpop.permute.xlu0 %85
    %vm87 = vcmask 195712
    %88 = vst.msk [vmem:[#allocation0] sm:$0x1] %vm87, %v86
    %s89 = scalar_lea.vmem %s0, 1
    %v90 = vld [vmem:[%s89] sm:$0x1]
    %91 = vrot.lane.b32.xlu0 %v90, 8
    %v92 = vpop.permute.xlu0 %91
    %vm93 = vcmask 130112
    %94 = vst.msk [vmem:[#allocation0] sm:$0x1] %vm93, %v92
    %s96 = sshll.u32 1, 1
    %s97 = ssub.s32 %s96, 1
    %v99 = vld [vmem:[#allocation0] sm:%s97]
    %s100 = sshll.u32 1, 1
    %s101 = ssub.s32 %s100, 1
    %102 = vst [vmem:[%s1] sm:%s101] %v99

// kernel: conv_block_forward.1
$region0: #{conv_block_forward.1}
  #allocation0 [shape = 'u32[]', space=smem, size = 0x4, offset = 0x4, fixed_abs, tag = 'smem constant byte address 0x4 - core index']
  #allocation1 [shape = 'u32[144,128]{1,0:T(1,128)}', space=vmem, size = 0x12000, scoped, tag = 'internal scratch']
  %s0 = inlined_call_operand.vmem [shape: f32[32,64], index: 0, kind: input, shape index: {}]
  %s1 = inlined_call_operand.vmem [shape: f32[3,64,128], index: 1, kind: input, shape index: {}]
  %s2 = inlined_call_operand.vmem [shape: f32[3,128,128], index: 2, kind: input, shape index: {}]
  %s3 = inlined_call_operand.vmem [shape: f32[32,32], index: 3, kind: input, shape index: {}]
  %s4 = inlined_call_operand.vmem [shape: f32[32,32], index: 4, kind: input, shape index: {}]
  %s5 = inlined_call_operand.vmem [shape: f32[128,128], index: 5, kind: input, shape index: {}]
  %s6 = inlined_call_operand.vmem [shape: f32[1,128], index: 6, kind: input, shape index: {}]
  %s7 = inlined_call_operand.vmem [shape: f32[1,128], index: 7, kind: input, shape index: {}]
  %s8 = inlined_call_operand.vmem [shape: f32[1,128], index: 8, kind: input, shape index: {}]
  %s9 = inlined_call_operand.vmem [shape: f32[1,128], index: 9, kind: input, shape index: {}]
  %s10 = inlined_call_operand.vmem [shape: f32[32,128], index: 10, kind: output, shape index: {}]
  %s11 = sld [smem:[#allocation0]]
  $region50: #{conv_block_forward.1} parent=0
    _
  %s13 = ssub.s32 1, %s11
  %s14 = scalar_select 0, %s13, %s11
  // Predicated region
  $region2: #{conv_block_forward.1} parent=0 // pred_check
    _
  $region3: #{conv_block_forward.1} parent=0 // pred_check_branch
    %16 = sbr.rel (0) target = $region5
  $region4: #{conv_block_forward.1} parent=0 // pred_region
    _
  $region5: #{conv_block_forward.1} parent=0 // pred_fallthru
    _
  // Predicated region
  $region6: #{conv_block_forward.1} parent=0 // pred_check
    _
  $region7: #{conv_block_forward.1} parent=0 // pred_check_branch
    %18 = sbr.rel (0) target = $region9
  $region8: #{conv_block_forward.1} parent=0 // pred_region
    _
  $region9: #{conv_block_forward.1} parent=0 // pred_fallthru
    _
  // Predicated region
  $region10: #{conv_block_forward.1} parent=0 // pred_check
    _
  $region11: #{conv_block_forward.1} parent=0 // pred_check_branch
    %20 = sbr.rel (0) target = $region13
  $region12: #{conv_block_forward.1} parent=0 // pred_region
    _
  $region13: #{conv_block_forward.1} parent=0 // pred_fallthru
    _
  // Predicated region
  $region14: #{conv_block_forward.1} parent=0 // pred_check
    _
  $region15: #{conv_block_forward.1} parent=0 // pred_check_branch
    %22 = sbr.rel (0) target = $region17
  $region16: #{conv_block_forward.1} parent=0 // pred_region
    _
  $region17: #{conv_block_forward.1} parent=0 // pred_fallthru
    _
  // Predicated region
  $region18: #{conv_block_forward.1} parent=0 // pred_check
    _
  $region19: #{conv_block_forward.1} parent=0 // pred_check_branch
    %24 = sbr.rel (0) target = $region21
  $region20: #{conv_block_forward.1} parent=0 // pred_region
    _
  $region21: #{conv_block_forward.1} parent=0 // pred_fallthru
    _
  // Predicated region
  $region22: #{conv_block_forward.1} parent=0 // pred_check
    _
  $region23: #{conv_block_forward.1} parent=0 // pred_check_branch
    %26 = sbr.rel (0) target = $region25
  $region24: #{conv_block_forward.1} parent=0 // pred_region
    _
  $region25: #{conv_block_forward.1} parent=0 // pred_fallthru
    _
  // Predicated region
  $region26: #{conv_block_forward.1} parent=0 // pred_check
    _
  $region27: #{conv_block_forward.1} parent=0 // pred_check_branch
    %28 = sbr.rel (0) target = $region29
  $region28: #{conv_block_forward.1} parent=0 // pred_region
    _
  $region29: #{conv_block_forward.1} parent=0 // pred_fallthru
    _
  // Predicated region
  $region30: #{conv_block_forward.1} parent=0 // pred_check
    _
  $region31: #{conv_block_forward.1} parent=0 // pred_check_branch
    %30 = sbr.rel (0) target = $region33
  $region32: #{conv_block_forward.1} parent=0 // pred_region
    _
  $region33: #{conv_block_forward.1} parent=0 // pred_fallthru
    _
  // Predicated region
  $region34: #{conv_block_forward.1} parent=0 // pred_check
    _
  $region35: #{conv_block_forward.1} parent=0 // pred_check_branch
    %32 = sbr.rel (0) target = $region37
  $region36: #{conv_block_forward.1} parent=0 // pred_region
    _
  $region37: #{conv_block_forward.1} parent=0 // pred_fallthru
    _
  // Predicated region
  $region38: #{conv_block_forward.1} parent=0 // pred_check
    _
  $region39: #{conv_block_forward.1} parent=0 // pred_check_branch
    %34 = sbr.rel (0) target = $region41
  $region40: #{conv_block_forward.1} parent=0 // pred_region
    _
  $region41: #{conv_block_forward.1} parent=0 // pred_fallthru
    _
  %v35 = vld [vmem:[%s3] sm:$0xff]
  %v36 = vld [vmem:[%s3 + $0x8] sm:$0xff]
  %v37 = vld [vmem:[%s3 + $0x10] sm:$0xff]
  %v38 = vld [vmem:[%s3 + $0x18] sm:$0xff]
  %v39 = vld [vmem:[%s4] sm:$0xff]
  %v40 = vld [vmem:[%s4 + $0x8] sm:$0xff]
  %v41 = vld [vmem:[%s4 + $0x10] sm:$0xff]
  %v42 = vld [vmem:[%s4 + $0x18] sm:$0xff]
  %v43 = vld [vmem:[%s5] sm:$0xff]
  %v44 = vld [vmem:[%s5 + $0x8] sm:$0xff]
  %v45 = vld [vmem:[%s5 + $0x10] sm:$0xff]
  %v46 = vld [vmem:[%s5 + $0x18] sm:$0xff]
  %v47 = vld [vmem:[%s5 + $0x20] sm:$0xff]
  %v48 = vld [vmem:[%s5 + $0x28] sm:$0xff]
  %v49 = vld [vmem:[%s5 + $0x30] sm:$0xff]
  %v50 = vld [vmem:[%s5 + $0x38] sm:$0xff]
  %v51 = vld [vmem:[%s5 + $0x40] sm:$0xff]
  %v52 = vld [vmem:[%s5 + $0x48] sm:$0xff]
  %v53 = vld [vmem:[%s5 + $0x50] sm:$0xff]
  %v54 = vld [vmem:[%s5 + $0x58] sm:$0xff]
  %v55 = vld [vmem:[%s5 + $0x60] sm:$0xff]
  %v56 = vld [vmem:[%s5 + $0x68] sm:$0xff]
  %v57 = vld [vmem:[%s5 + $0x70] sm:$0xff]
  %v58 = vld [vmem:[%s5 + $0x78] sm:$0xff]
  %v59 = vld [vmem:[%s0] sm:$0xff]
  %v60 = vld [vmem:[%s0 + $0x8] sm:$0xff]
  %v61 = vld [vmem:[%s0 + $0x10] sm:$0xff]
  %v62 = vld [vmem:[%s0 + $0x18] sm:$0xff]
  %v63 = vld [vmem:[%s1] sm:$0xff]
  %v64 = vld [vmem:[%s1 + $0x8] sm:$0xff]
  %v65 = vld [vmem:[%s1 + $0x10] sm:$0xff]
  %v66 = vld [vmem:[%s1 + $0x18] sm:$0xff]
  %v67 = vld [vmem:[%s1 + $0x20] sm:$0xff]
  %v68 = vld [vmem:[%s1 + $0x28] sm:$0xff]
  %v69 = vld [vmem:[%s1 + $0x30] sm:$0xff]
  %v70 = vld [vmem:[%s1 + $0x38] sm:$0xff]
  %vm71 = vcmask 523264
  %v73 = vsel %vm71, %v59, 0
  %v76 = vsel %vm71, %v60, 0
  %v79 = vsel %vm71, %v61, 0
  %v82 = vsel %vm71, %v62, 0
  %84 = vmatprep.subr.mxu0 0.0
  %85 = vmatpush1.msra.mxu0 0.0
  %86 = vmatprep.subr.mxu0 0.0
  %87 = vmatpush1.msra.mxu0 0.0
  %88 = vmatprep.subr.mxu0 0.0
  %89 = vmatpush1.msra.mxu0 0.0
  %90 = vmatprep.subr.mxu0 0.0
  %91 = vmatpush1.msra.mxu0 0.0
  %92 = vmatprep.subr.mxu0 0.0
  %93 = vmatpush1.msra.mxu0 0.0
  %94 = vmatprep.subr.mxu0 0.0
  %95 = vmatpush1.msra.mxu0 0.0
  %96 = vmatprep.subr.mxu0 0.0
  %97 = vmatpush1.msra.mxu0 0.0
  %98 = vmatprep.subr.mxu0 0.0
  %99 = vmatpush1.msra.mxu0 0.0
  %100 = vmatprep.subr.mxu0 0.0
  %101 = vmatpush1.msra.mxu0 %v70
  %102 = vmatprep.subr.mxu0 0.0
  %103 = vmatpush1.msra.mxu0 %v69
  %104 = vmatprep.subr.mxu0 0.0
  %105 = vmatpush1.msra.mxu0 %v68
  %106 = vmatprep.subr.mxu0 0.0
  %107 = vmatpush1.msra.mxu0 %v67
  %108 = vmatprep.subr.mxu0 0.0
  %109 = vmatpush1.msra.mxu0 %v66
  %110 = vmatprep.subr.mxu0 0.0
  %111 = vmatpush1.msra.mxu0 %v65
  %112 = vmatprep.subr.mxu0 0.0
  %113 = vmatpush1.msra.mxu0 %v64
  %114 = vmatprep.subr.mxu0 0.0
  %115 = vmatpush1.msra.mxu0 %v63
  %116 = vmatprep.subr.mxu0 0.0
  %117 = vmatpush2.msra.mxu0 0.0
  %118 = vmatprep.subr.mxu0 0.0
  %119 = vmatpush2.msra.mxu0 0.0
  %120 = vmatprep.subr.mxu0 0.0
  %121 = vmatpush2.msra.mxu0 0.0
  %122 = vmatprep.subr.mxu0 0.0
  %123 = vmatpush2.msra.mxu0 0.0
  %124 = vmatprep.subr.mxu0 0.0
  %125 = vmatpush2.msra.mxu0 0.0
  %126 = vmatprep.subr.mxu0 0.0
  %127 = vmatpush2.msra.mxu0 0.0
  %128 = vmatprep.subr.mxu0 0.0
  %129 = vmatpush2.msra.mxu0 0.0
  %130 = vmatprep.subr.mxu0 0.0
  %131 = vmatpush2.msra.mxu0 0.0
  %132 = vmatprep.subr.mxu0 0.0
  %133 = vmatpush2.msra.mxu0 0.0
  %134 = vmatprep.subr.mxu0 0.0
  %135 = vmatpush2.msra.mxu0 0.0
  %136 = vmatprep.subr.mxu0 0.0
  %137 = vmatpush2.msra.mxu0 0.0
  %138 = vmatprep.subr.mxu0 0.0
  %139 = vmatpush2.msra.mxu0 0.0
  %140 = vmatprep.subr.mxu0 0.0
  %141 = vmatpush2.msra.mxu0 0.0
  %142 = vmatprep.subr.mxu0 0.0
  %143 = vmatpush2.msra.mxu0 0.0
  %144 = vmatprep.subr.mxu0 0.0
  %145 = vmatpush2.msra.mxu0 0.0
  %146 = vmatprep.subr.mxu0 0.0
  %147 = vmatpush2.msra.mxu0 0.0
  %148 = vmatprep.mubr.f32.mxu0 0.0
  %149 = vmatmul.mubr.f32.gmra.mxu0 %v73
  %v150 = vpop.f32.mrf.mxu0
  %v151 = vadd.f32 0.0, %v150
  %v152 = vpop.f32.mrf.mxu0
  %153 = vmatprep.mubr.f32.mxu0 0.0
  %154 = vmatmul.mubr.f32.gmra.mxu0 %v76
  %v155 = vpop.f32.mrf.mxu0
  %v156 = vadd.f32 0.0, %v155
  %v157 = vpop.f32.mrf.mxu0
  %158 = vmatprep.mubr.f32.mxu0 0.0
  %159 = vmatmul.mubr.f32.gmra.mxu0 %v79
  %v160 = vpop.f32.mrf.mxu0
  %v161 = vadd.f32 0.0, %v160
  %v162 = vpop.f32.mrf.mxu0
  %163 = vmatprep.mubr.f32.mxu0 0.0
  %164 = vmatmul.mubr.f32.gmra.mxu0 %v82
  %v165 = vpop.f32.mrf.mxu0
  %v166 = vadd.f32 0.0, %v165
  %v167 = vpop.f32.mrf.mxu0
  %168 = vdwg.mxu0
  %s169 = scalar_lea.vmem %s1, 64
  %v170 = vld [vmem:[%s169] sm:$0xff]
  %v171 = vld [vmem:[%s169 + $0x8] sm:$0xff]
  %v172 = vld [vmem:[%s169 + $0x10] sm:$0xff]
  %v173 = vld [vmem:[%s169 + $0x18] sm:$0xff]
  %v174 = vld [vmem:[%s169 + $0x20] sm:$0xff]
  %v175 = vld [vmem:[%s169 + $0x28] sm:$0xff]
  %v176 = vld [vmem:[%s169 + $0x30] sm:$0xff]
  %v177 = vld [vmem:[%s169 + $0x38] sm:$0xff]
  %178 = vmatprep.subr.mxu0 0.0
  %179 = vmatpush1.msra.mxu0 0.0
  %180 = vmatprep.subr.mxu0 0.0
  %181 = vmatpush1.msra.mxu0 0.0
  %182 = vmatprep.subr.mxu0 0.0
  %183 = vmatpush1.msra.mxu0 0.0
  %184 = vmatprep.subr.mxu0 0.0
  %185 = vmatpush1.msra.mxu0 0.0
  %186 = vmatprep.subr.mxu0 0.0
  %187 = vmatpush1.msra.mxu0 0.0
  %188 = vmatprep.subr.mxu0 0.0
  %189 = vmatpush1.msra.mxu0 0.0
  %190 = vmatprep.subr.mxu0 0.0
  %191 = vmatpush1.msra.mxu0 0.0
  %192 = vmatprep.subr.mxu0 0.0
  %193 = vmatpush1.msra.mxu0 0.0
  %194 = vmatprep.subr.mxu0 0.0
  %195 = vmatpush1.msra.mxu0 %v177
  %196 = vmatprep.subr.mxu0 0.0
  %197 = vmatpush1.msra.mxu0 %v176
  %198 = vmatprep.subr.mxu0 0.0
  %199 = vmatpush1.msra.mxu0 %v175
  %200 = vmatprep.subr.mxu0 0.0
  %201 = vmatpush1.msra.mxu0 %v174
  %202 = vmatprep.subr.mxu0 0.0
  %203 = vmatpush1.msra.mxu0 %v173
  %204 = vmatprep.subr.mxu0 0.0
  %205 = vmatpush1.msra.mxu0 %v172
  %206 = vmatprep.subr.mxu0 0.0
  %207 = vmatpush1.msra.mxu0 %v171
  %208 = vmatprep.subr.mxu0 0.0
  %209 = vmatpush1.msra.mxu0 %v170
  %210 = vmatprep.subr.mxu0 0.0
  %211 = vmatpush2.msra.mxu0 0.0
  %212 = vmatprep.subr.mxu0 0.0
  %213 = vmatpush2.msra.mxu0 0.0
  %214 = vmatprep.subr.mxu0 0.0
  %215 = vmatpush2.msra.mxu0 0.0
  %216 = vmatprep.subr.mxu0 0.0
  %217 = vmatpush2.msra.mxu0 0.0
  %218 = vmatprep.subr.mxu0 0.0
  %219 = vmatpush2.msra.mxu0 0.0
  %220 = vmatprep.subr.mxu0 0.0
  %221 = vmatpush2.msra.mxu0 0.0
  %222 = vmatprep.subr.mxu0 0.0
  %223 = vmatpush2.msra.mxu0 0.0
  %224 = vmatprep.subr.mxu0 0.0
  %225 = vmatpush2.msra.mxu0 0.0
  %226 = vmatprep.subr.mxu0 0.0
  %227 = vmatpush2.msra.mxu0 0.0
  %228 = vmatprep.subr.mxu0 0.0
  %229 = vmatpush2.msra.mxu0 0.0
  %230 = vmatprep.subr.mxu0 0.0
  %231 = vmatpush2.msra.mxu0 0.0
  %232 = vmatprep.subr.mxu0 0.0
  %233 = vmatpush2.msra.mxu0 0.0
  %234 = vmatprep.subr.mxu0 0.0
  %235 = vmatpush2.msra.mxu0 0.0
  %236 = vmatprep.subr.mxu0 0.0
  %237 = vmatpush2.msra.mxu0 0.0
  %238 = vmatprep.subr.mxu0 0.0
  %239 = vmatpush2.msra.mxu0 0.0
  %240 = vmatprep.subr.mxu0 0.0
  %241 = vmatpush2.msra.mxu0 0.0
  %242 = vmatprep.mubr.f32.mxu0 0.0
  %243 = vmatmul.mubr.f32.gmra.mxu0 %v73
  %v244 = vpop.f32.mrf.mxu0
  %v245 = vadd.f32 0.0, %v244
  %v246 = vpop.f32.mrf.mxu0
  %247 = vmatprep.mubr.f32.mxu0 0.0
  %248 = vmatmul.mubr.f32.gmra.mxu0 %v76
  %v249 = vpop.f32.mrf.mxu0
  %v250 = vadd.f32 0.0, %v249
  %v251 = vpop.f32.mrf.mxu0
  %252 = vmatprep.mubr.f32.mxu0 0.0
  %253 = vmatmul.mubr.f32.gmra.mxu0 %v79
  %v254 = vpop.f32.mrf.mxu0
  %v255 = vadd.f32 0.0, %v254
  %v256 = vpop.f32.mrf.mxu0
  %257 = vmatprep.mubr.f32.mxu0 0.0
  %258 = vmatmul.mubr.f32.gmra.mxu0 %v82
  %v259 = vpop.f32.mrf.mxu0
  %v260 = vadd.f32 0.0, %v259
  %v261 = vpop.f32.mrf.mxu0
  %262 = vdwg.mxu0
  %s263 = scalar_lea.vmem %s1, 128
  %v264 = vld [vmem:[%s263] sm:$0xff]
  %v265 = vld [vmem:[%s263 + $0x8] sm:$0xff]
  %v266 = vld [vmem:[%s263 + $0x10] sm:$0xff]
  %v267 = vld [vmem:[%s263 + $0x18] sm:$0xff]
  %v268 = vld [vmem:[%s263 + $0x20] sm:$0xff]
  %v269 = vld [vmem:[%s263 + $0x28] sm:$0xff]
  %v270 = vld [vmem:[%s263 + $0x30] sm:$0xff]
  %v271 = vld [vmem:[%s263 + $0x38] sm:$0xff]
  %272 = vmatprep.subr.mxu0 0.0
  %273 = vmatpush1.msra.mxu0 0.0
  %274 = vmatprep.subr.mxu0 0.0
  %275 = vmatpush1.msra.mxu0 0.0
  %276 = vmatprep.subr.mxu0 0.0
  %277 = vmatpush1.msra.mxu0 0.0
  %278 = vmatprep.subr.mxu0 0.0
  %279 = vmatpush1.msra.mxu0 0.0
  %280 = vmatprep.subr.mxu0 0.0
  %281 = vmatpush1.msra.mxu0 0.0
  %282 = vmatprep.subr.mxu0 0.0
  %283 = vmatpush1.msra.mxu0 0.0
  %284 = vmatprep.subr.mxu0 0.0
  %285 = vmatpush1.msra.mxu0 0.0
  %286 = vmatprep.subr.mxu0 0.0
  %287 = vmatpush1.msra.mxu0 0.0
  %288 = vmatprep.subr.mxu0 0.0
  %289 = vmatpush1.msra.mxu0 %v271
  %290 = vmatprep.subr.mxu0 0.0
  %291 = vmatpush1.msra.mxu0 %v270
  %292 = vmatprep.subr.mxu0 0.0
  %293 = vmatpush1.msra.mxu0 %v269
  %294 = vmatprep.subr.mxu0 0.0
  %295 = vmatpush1.msra.mxu0 %v268
  %296 = vmatprep.subr.mxu0 0.0
  %297 = vmatpush1.msra.mxu0 %v267
  %298 = vmatprep.subr.mxu0 0.0
  %299 = vmatpush1.msra.mxu0 %v266
  %300 = vmatprep.subr.mxu0 0.0
  %301 = vmatpush1.msra.mxu0 %v265
  %302 = vmatprep.subr.mxu0 0.0
  %303 = vmatpush1.msra.mxu0 %v264
  %304 = vmatprep.subr.mxu0 0.0
  %305 = vmatpush2.msra.mxu0 0.0
  %306 = vmatprep.subr.mxu0 0.0
  %307 = vmatpush2.msra.mxu0 0.0
  %308 = vmatprep.subr.mxu0 0.0
  %309 = vmatpush2.msra.mxu0 0.0
  %310 = vmatprep.subr.mxu0 0.0
  %311 = vmatpush2.msra.mxu0 0.0
  %312 = vmatprep.subr.mxu0 0.0
  %313 = vmatpush2.msra.mxu0 0.0
  %314 = vmatprep.subr.mxu0 0.0
  %315 = vmatpush2.msra.mxu0 0.0
  %316 = vmatprep.subr.mxu0 0.0
  %317 = vmatpush2.msra.mxu0 0.0
  %318 = vmatprep.subr.mxu0 0.0
  %319 = vmatpush2.msra.mxu0 0.0
  %320 = vmatprep.subr.mxu0 0.0
  %321 = vmatpush2.msra.mxu0 0.0
  %322 = vmatprep.subr.mxu0 0.0
  %323 = vmatpush2.msra.mxu0 0.0
  %324 = vmatprep.subr.mxu0 0.0
  %325 = vmatpush2.msra.mxu0 0.0
  %326 = vmatprep.subr.mxu0 0.0
  %327 = vmatpush2.msra.mxu0 0.0
  %328 = vmatprep.subr.mxu0 0.0
  %329 = vmatpush2.msra.mxu0 0.0
  %330 = vmatprep.subr.mxu0 0.0
  %331 = vmatpush2.msra.mxu0 0.0
  %332 = vmatprep.subr.mxu0 0.0
  %333 = vmatpush2.msra.mxu0 0.0
  %334 = vmatprep.subr.mxu0 0.0
  %335 = vmatpush2.msra.mxu0 0.0
  %336 = vmatprep.mubr.f32.mxu0 0.0
  %337 = vmatmul.mubr.f32.gmra.mxu0 %v73
  %v338 = vpop.f32.mrf.mxu0
  %v339 = vadd.f32 0.0, %v338
  %v340 = vpop.f32.mrf.mxu0
  %341 = vmatprep.mubr.f32.mxu0 0.0
  %342 = vmatmul.mubr.f32.gmra.mxu0 %v76
  %v343 = vpop.f32.mrf.mxu0
  %v344 = vadd.f32 0.0, %v343
  %v345 = vpop.f32.mrf.mxu0
  %346 = vmatprep.mubr.f32.mxu0 0.0
  %347 = vmatmul.mubr.f32.gmra.mxu0 %v79
  %v348 = vpop.f32.mrf.mxu0
  %v349 = vadd.f32 0.0, %v348
  %v350 = vpop.f32.mrf.mxu0
  %351 = vmatprep.mubr.f32.mxu0 0.0
  %352 = vmatmul.mubr.f32.gmra.mxu0 %v82
  %v353 = vpop.f32.mrf.mxu0
  %v354 = vadd.f32 0.0, %v353
  %v355 = vpop.f32.mrf.mxu0
  %356 = vdwg.mxu0
  %vm357 = vcmask 261120
  %v359 = vsel %vm357, %v35, 0
  %v362 = vsel %vm357, %v36, 0
  %v365 = vsel %vm357, %v37, 0
  %v368 = vsel %vm357, %v38, 0
  %370 = vmatprep.subr.mxu0 0.0
  %371 = vmatpush1.msra.mxu0 0.0
  %372 = vmatprep.subr.mxu0 0.0
  %373 = vmatpush1.msra.mxu0 0.0
  %374 = vmatprep.subr.mxu0 0.0
  %375 = vmatpush1.msra.mxu0 0.0
  %376 = vmatprep.subr.mxu0 0.0
  %377 = vmatpush1.msra.mxu0 0.0
  %378 = vmatprep.subr.mxu0 0.0
  %379 = vmatpush1.msra.mxu0 0.0
  %380 = vmatprep.subr.mxu0 0.0
  %381 = vmatpush1.msra.mxu0 0.0
  %382 = vmatprep.subr.mxu0 0.0
  %383 = vmatpush1.msra.mxu0 0.0
  %384 = vmatprep.subr.mxu0 0.0
  %385 = vmatpush1.msra.mxu0 0.0
  %386 = vmatprep.subr.mxu0 0.0
  %387 = vmatpush1.msra.mxu0 0.0
  %388 = vmatprep.subr.mxu0 0.0
  %389 = vmatpush1.msra.mxu0 0.0
  %390 = vmatprep.subr.mxu0 0.0
  %391 = vmatpush1.msra.mxu0 0.0
  %392 = vmatprep.subr.mxu0 0.0
  %393 = vmatpush1.msra.mxu0 0.0
  %394 = vmatprep.subr.mxu0 0.0
  %395 = vmatpush1.msra.mxu0 %v166
  %396 = vmatprep.subr.mxu0 0.0
  %397 = vmatpush1.msra.mxu0 %v161
  %398 = vmatprep.subr.mxu0 0.0
  %399 = vmatpush1.msra.mxu0 %v156
  %400 = vmatprep.subr.mxu0 0.0
  %401 = vmatpush1.msra.mxu0 %v151
  %402 = vmatprep.subr.mxu0 0.0
  %403 = vmatpush2.msra.mxu0 0.0
  %404 = vmatprep.subr.mxu0 0.0
  %405 = vmatpush2.msra.mxu0 0.0
  %406 = vmatprep.subr.mxu0 0.0
  %407 = vmatpush2.msra.mxu0 0.0
  %408 = vmatprep.subr.mxu0 0.0
  %409 = vmatpush2.msra.mxu0 0.0
  %410 = vmatprep.subr.mxu0 0.0
  %411 = vmatpush2.msra.mxu0 0.0
  %412 = vmatprep.subr.mxu0 0.0
  %413 = vmatpush2.msra.mxu0 0.0
  %414 = vmatprep.subr.mxu0 0.0
  %415 = vmatpush2.msra.mxu0 0.0
  %416 = vmatprep.subr.mxu0 0.0
  %417 = vmatpush2.msra.mxu0 0.0
  %418 = vmatprep.subr.mxu0 0.0
  %419 = vmatpush2.msra.mxu0 0.0
  %420 = vmatprep.subr.mxu0 0.0
  %421 = vmatpush2.msra.mxu0 0.0
  %422 = vmatprep.subr.mxu0 0.0
  %423 = vmatpush2.msra.mxu0 0.0
  %424 = vmatprep.subr.mxu0 0.0
  %425 = vmatpush2.msra.mxu0 0.0
  %426 = vmatprep.subr.mxu0 0.0
  %427 = vmatpush2.msra.mxu0 0.0
  %428 = vmatprep.subr.mxu0 0.0
  %429 = vmatpush2.msra.mxu0 0.0
  %430 = vmatprep.subr.mxu0 0.0
  %431 = vmatpush2.msra.mxu0 0.0
  %432 = vmatprep.subr.mxu0 0.0
  %433 = vmatpush2.msra.mxu0 0.0
  %434 = vmatprep.mubr.f32.mxu0 0.0
  %435 = vmatmul.mubr.f32.gmra.mxu0 %v359
  %v436 = vpop.f32.mrf.mxu0
  %v437 = vadd.f32 %v245, %v436
  %v438 = vpop.f32.mrf.mxu0
  %439 = vmatprep.mubr.f32.mxu0 0.0
  %440 = vmatmul.mubr.f32.gmra.mxu0 %v362
  %v441 = vpop.f32.mrf.mxu0
  %v442 = vadd.f32 %v250, %v441
  %v443 = vpop.f32.mrf.mxu0
  %444 = vmatprep.mubr.f32.mxu0 0.0
  %445 = vmatmul.mubr.f32.gmra.mxu0 %v365
  %v446 = vpop.f32.mrf.mxu0
  %v447 = vadd.f32 %v255, %v446
  %v448 = vpop.f32.mrf.mxu0
  %449 = vmatprep.mubr.f32.mxu0 0.0
  %450 = vmatmul.mubr.f32.gmra.mxu0 %v368
  %v451 = vpop.f32.mrf.mxu0
  %v452 = vadd.f32 %v260, %v451
  %v453 = vpop.f32.mrf.mxu0
  %454 = vdwg.mxu0
  %v456 = vsel %vm357, %v39, 0
  %v459 = vsel %vm357, %v40, 0
  %v462 = vsel %vm357, %v41, 0
  %v465 = vsel %vm357, %v42, 0
  %467 = vmatprep.subr.mxu0 0.0
  %468 = vmatpush1.msra.mxu0 0.0
  %469 = vmatprep.subr.mxu0 0.0
  %470 = vmatpush1.msra.mxu0 0.0
  %471 = vmatprep.subr.mxu0 0.0
  %472 = vmatpush1.msra.mxu0 0.0
  %473 = vmatprep.subr.mxu0 0.0
  %474 = vmatpush1.msra.mxu0 0.0
  %475 = vmatprep.subr.mxu0 0.0
  %476 = vmatpush1.msra.mxu0 0.0
  %477 = vmatprep.subr.mxu0 0.0
  %478 = vmatpush1.msra.mxu0 0.0
  %479 = vmatprep.subr.mxu0 0.0
  %480 = vmatpush1.msra.mxu0 0.0
  %481 = vmatprep.subr.mxu0 0.0
  %482 = vmatpush1.msra.mxu0 0.0
  %483 = vmatprep.subr.mxu0 0.0
  %484 = vmatpush1.msra.mxu0 0.0
  %485 = vmatprep.subr.mxu0 0.0
  %486 = vmatpush1.msra.mxu0 0.0
  %487 = vmatprep.subr.mxu0 0.0
  %488 = vmatpush1.msra.mxu0 0.0
  %489 = vmatprep.subr.mxu0 0.0
  %490 = vmatpush1.msra.mxu0 0.0
  %491 = vmatprep.subr.mxu0 0.0
  %492 = vmatpush1.msra.mxu0 %v354
  %493 = vmatprep.subr.mxu0 0.0
  %494 = vmatpush1.msra.mxu0 %v349
  %495 = vmatprep.subr.mxu0 0.0
  %496 = vmatpush1.msra.mxu0 %v344
  %497 = vmatprep.subr.mxu0 0.0
  %498 = vmatpush1.msra.mxu0 %v339
  %499 = vmatprep.subr.mxu0 0.0
  %500 = vmatpush2.msra.mxu0 0.0
  %501 = vmatprep.subr.mxu0 0.0
  %502 = vmatpush2.msra.mxu0 0.0
  %503 = vmatprep.subr.mxu0 0.0
  %504 = vmatpush2.msra.mxu0 0.0
  %505 = vmatprep.subr.mxu0 0.0
  %506 = vmatpush2.msra.mxu0 0.0
  %507 = vmatprep.subr.mxu0 0.0
  %508 = vmatpush2.msra.mxu0 0.0
  %509 = vmatprep.subr.mxu0 0.0
  %510 = vmatpush2.msra.mxu0 0.0
  %511 = vmatprep.subr.mxu0 0.0
  %512 = vmatpush2.msra.mxu0 0.0
  %513 = vmatprep.subr.mxu0 0.0
  %514 = vmatpush2.msra.mxu0 0.0
  %515 = vmatprep.subr.mxu0 0.0
  %516 = vmatpush2.msra.mxu0 0.0
  %517 = vmatprep.subr.mxu0 0.0
  %518 = vmatpush2.msra.mxu0 0.0
  %519 = vmatprep.subr.mxu0 0.0
  %520 = vmatpush2.msra.mxu0 0.0
  %521 = vmatprep.subr.mxu0 0.0
  %522 = vmatpush2.msra.mxu0 0.0
  %523 = vmatprep.subr.mxu0 0.0
  %524 = vmatpush2.msra.mxu0 0.0
  %525 = vmatprep.subr.mxu0 0.0
  %526 = vmatpush2.msra.mxu0 0.0
  %527 = vmatprep.subr.mxu0 0.0
  %528 = vmatpush2.msra.mxu0 0.0
  %529 = vmatprep.subr.mxu0 0.0
  %530 = vmatpush2.msra.mxu0 0.0
  %531 = vmatprep.mubr.f32.mxu0 0.0
  %532 = vmatmul.mubr.f32.gmra.mxu0 %v456
  %v533 = vpop.f32.mrf.mxu0
  %v534 = vadd.f32 0.0, %v533
  %v535 = vpop.f32.mrf.mxu0
  %536 = vmatprep.mubr.f32.mxu0 0.0
  %537 = vmatmul.mubr.f32.gmra.mxu0 %v459
  %v538 = vpop.f32.mrf.mxu0
  %v539 = vadd.f32 0.0, %v538
  %v540 = vpop.f32.mrf.mxu0
  %541 = vmatprep.mubr.f32.mxu0 0.0
  %542 = vmatmul.mubr.f32.gmra.mxu0 %v462
  %v543 = vpop.f32.mrf.mxu0
  %v544 = vadd.f32 0.0, %v543
  %v545 = vpop.f32.mrf.mxu0
  %546 = vmatprep.mubr.f32.mxu0 0.0
  %547 = vmatmul.mubr.f32.gmra.mxu0 %v465
  %v548 = vpop.f32.mrf.mxu0
  %v549 = vadd.f32 0.0, %v548
  %v550 = vpop.f32.mrf.mxu0
  %551 = vdwg.mxu0
  %v552 = vadd.f32 %v437, %v534
  %v553 = vadd.f32 %v442, %v539
  %v554 = vadd.f32 %v447, %v544
  %v555 = vadd.f32 %v452, %v549
  %v556 = vld [vmem:[%s6] sm:$0x1]
  %v557 = vld [vmem:[%s7] sm:$0x1]
  %558 = vmatprep.subr.mxu0 0.0
  %559 = vmatpush1.msra.mxu0 %v58
  %560 = vmatprep.subr.mxu0 0.0
  %561 = vmatpush1.msra.mxu0 %v57
  %562 = vmatprep.subr.mxu0 0.0
  %563 = vmatpush1.msra.mxu0 %v56
  %564 = vmatprep.subr.mxu0 0.0
  %565 = vmatpush1.msra.mxu0 %v55
  %566 = vmatprep.subr.mxu0 0.0
  %567 = vmatpush1.msra.mxu0 %v54
  %568 = vmatprep.subr.mxu0 0.0
  %569 = vmatpush1.msra.mxu0 %v53
  %570 = vmatprep.subr.mxu0 0.0
  %571 = vmatpush1.msra.mxu0 %v52
  %572 = vmatprep.subr.mxu0 0.0
  %573 = vmatpush1.msra.mxu0 %v51
  %574 = vmatprep.subr.mxu0 0.0
  %575 = vmatpush1.msra.mxu0 %v50
  %576 = vmatprep.subr.mxu0 0.0
  %577 = vmatpush1.msra.mxu0 %v49
  %578 = vmatprep.subr.mxu0 0.0
  %579 = vmatpush1.msra.mxu0 %v48
  %580 = vmatprep.subr.mxu0 0.0
  %581 = vmatpush1.msra.mxu0 %v47
  %582 = vmatprep.subr.mxu0 0.0
  %583 = vmatpush1.msra.mxu0 %v46
  %584 = vmatprep.subr.mxu0 0.0
  %585 = vmatpush1.msra.mxu0 %v45
  %586 = vmatprep.subr.mxu0 0.0
  %587 = vmatpush1.msra.mxu0 %v44
  %588 = vmatprep.subr.mxu0 0.0
  %589 = vmatpush1.msra.mxu0 %v43
  %590 = vmatprep.subr.mxu0 0.0
  %591 = vmatpush2.msra.mxu0 0.0
  %592 = vmatprep.subr.mxu0 0.0
  %593 = vmatpush2.msra.mxu0 0.0
  %594 = vmatprep.subr.mxu0 0.0
  %595 = vmatpush2.msra.mxu0 0.0
  %596 = vmatprep.subr.mxu0 0.0
  %597 = vmatpush2.msra.mxu0 0.0
  %598 = vmatprep.subr.mxu0 0.0
  %599 = vmatpush2.msra.mxu0 0.0
  %600 = vmatprep.subr.mxu0 0.0
  %601 = vmatpush2.msra.mxu0 0.0
  %602 = vmatprep.subr.mxu0 0.0
  %603 = vmatpush2.msra.mxu0 0.0
  %604 = vmatprep.subr.mxu0 0.0
  %605 = vmatpush2.msra.mxu0 0.0
  %606 = vmatprep.subr.mxu0 0.0
  %607 = vmatpush2.msra.mxu0 0.0
  %608 = vmatprep.subr.mxu0 0.0
  %609 = vmatpush2.msra.mxu0 0.0
  %610 = vmatprep.subr.mxu0 0.0
  %611 = vmatpush2.msra.mxu0 0.0
  %612 = vmatprep.subr.mxu0 0.0
  %613 = vmatpush2.msra.mxu0 0.0
  %614 = vmatprep.subr.mxu0 0.0
  %615 = vmatpush2.msra.mxu0 0.0
  %616 = vmatprep.subr.mxu0 0.0
  %617 = vmatpush2.msra.mxu0 0.0
  %618 = vmatprep.subr.mxu0 0.0
  %619 = vmatpush2.msra.mxu0 0.0
  %620 = vmatprep.subr.mxu0 0.0
  %621 = vmatpush2.msra.mxu0 0.0
  %622 = vmatprep.mubr.f32.mxu0 0.0
  %623 = vmatmul.mubr.f32.gmra.mxu0 %v552
  %v624 = vpop.f32.mrf.mxu0
  %v625 = vadd.f32 0.0, %v624
  %v626 = vpop.f32.mrf.mxu0
  %627 = vmatprep.mubr.f32.mxu0 0.0
  %628 = vmatmul.mubr.f32.gmra.mxu0 %v553
  %v629 = vpop.f32.mrf.mxu0
  %v630 = vadd.f32 0.0, %v629
  %v631 = vpop.f32.mrf.mxu0
  %632 = vmatprep.mubr.f32.mxu0 0.0
  %633 = vmatmul.mubr.f32.gmra.mxu0 %v554
  %v634 = vpop.f32.mrf.mxu0
  %v635 = vadd.f32 0.0, %v634
  %v636 = vpop.f32.mrf.mxu0
  %637 = vmatprep.mubr.f32.mxu0 0.0
  %638 = vmatmul.mubr.f32.gmra.mxu0 %v555
  %v639 = vpop.f32.mrf.mxu0
  %v640 = vadd.f32 0.0, %v639
  %v641 = vpop.f32.mrf.mxu0
  %642 = vdwg.mxu0
  %v643 = vadd.f32 %v625, %v630
  %v644 = vadd.f32 %v643, %v635
  %v645 = vadd.f32 %v644, %v640
  %v646 = vrot.slane %v645, 4
  %v647 = vadd.f32 %v645, %v646
  %v648 = vrot.slane %v647, 2
  %v649 = vadd.f32 %v647, %v648
  %v650 = vrot.slane %v649, 1
  %v651 = vadd.f32 %v649, %v650
  %v652 = vmul.f32 %v552, %v552
  %v653 = vmul.f32 %v553, %v553
  %v654 = vmul.f32 %v554, %v554
  %v655 = vmul.f32 %v555, %v555
  %656 = vmatprep.subr.mxu0 0.0
  %657 = vmatpush1.msra.mxu0 %v58
  %658 = vmatprep.subr.mxu0 0.0
  %659 = vmatpush1.msra.mxu0 %v57
  %660 = vmatprep.subr.mxu0 0.0
  %661 = vmatpush1.msra.mxu0 %v56
  %662 = vmatprep.subr.mxu0 0.0
  %663 = vmatpush1.msra.mxu0 %v55
  %664 = vmatprep.subr.mxu0 0.0
  %665 = vmatpush1.msra.mxu0 %v54
  %666 = vmatprep.subr.mxu0 0.0
  %667 = vmatpush1.msra.mxu0 %v53
  %668 = vmatprep.subr.mxu0 0.0
  %669 = vmatpush1.msra.mxu0 %v52
  %670 = vmatprep.subr.mxu0 0.0
  %671 = vmatpush1.msra.mxu0 %v51
  %672 = vmatprep.subr.mxu0 0.0
  %673 = vmatpush1.msra.mxu0 %v50
  %674 = vmatprep.subr.mxu0 0.0
  %675 = vmatpush1.msra.mxu0 %v49
  %676 = vmatprep.subr.mxu0 0.0
  %677 = vmatpush1.msra.mxu0 %v48
  %678 = vmatprep.subr.mxu0 0.0
  %679 = vmatpush1.msra.mxu0 %v47
  %680 = vmatprep.subr.mxu0 0.0
  %681 = vmatpush1.msra.mxu0 %v46
  %682 = vmatprep.subr.mxu0 0.0
  %683 = vmatpush1.msra.mxu0 %v45
  %684 = vmatprep.subr.mxu0 0.0
  %685 = vmatpush1.msra.mxu0 %v44
  %686 = vmatprep.subr.mxu0 0.0
  %687 = vmatpush1.msra.mxu0 %v43
  %688 = vmatprep.subr.mxu0 0.0
  %689 = vmatpush2.msra.mxu0 0.0
  %690 = vmatprep.subr.mxu0 0.0
  %691 = vmatpush2.msra.mxu0 0.0
  %692 = vmatprep.subr.mxu0 0.0
  %693 = vmatpush2.msra.mxu0 0.0
  %694 = vmatprep.subr.mxu0 0.0
  %695 = vmatpush2.msra.mxu0 0.0
  %696 = vmatprep.subr.mxu0 0.0
  %697 = vmatpush2.msra.mxu0 0.0
  %698 = vmatprep.subr.mxu0 0.0
  %699 = vmatpush2.msra.mxu0 0.0
  %700 = vmatprep.subr.mxu0 0.0
  %701 = vmatpush2.msra.mxu0 0.0
  %702 = vmatprep.subr.mxu0 0.0
  %703 = vmatpush2.msra.mxu0 0.0
  %704 = vmatprep.subr.mxu0 0.0
  %705 = vmatpush2.msra.mxu0 0.0
  %706 = vmatprep.subr.mxu0 0.0
  %707 = vmatpush2.msra.mxu0 0.0
  %708 = vmatprep.subr.mxu0 0.0
  %709 = vmatpush2.msra.mxu0 0.0
  %710 = vmatprep.subr.mxu0 0.0
  %711 = vmatpush2.msra.mxu0 0.0
  %712 = vmatprep.subr.mxu0 0.0
  %713 = vmatpush2.msra.mxu0 0.0
  %714 = vmatprep.subr.mxu0 0.0
  %715 = vmatpush2.msra.mxu0 0.0
  %716 = vmatprep.subr.mxu0 0.0
  %717 = vmatpush2.msra.mxu0 0.0
  %718 = vmatprep.subr.mxu0 0.0
  %719 = vmatpush2.msra.mxu0 0.0
  %720 = vmatprep.mubr.f32.mxu0 0.0
  %721 = vmatmul.mubr.f32.gmra.mxu0 %v652
  %v722 = vpop.f32.mrf.mxu0
  %v723 = vadd.f32 0.0, %v722
  %v724 = vpop.f32.mrf.mxu0
  %725 = vmatprep.mubr.f32.mxu0 0.0
  %726 = vmatmul.mubr.f32.gmra.mxu0 %v653
  %v727 = vpop.f32.mrf.mxu0
  %v728 = vadd.f32 0.0, %v727
  %v729 = vpop.f32.mrf.mxu0
  %730 = vmatprep.mubr.f32.mxu0 0.0
  %731 = vmatmul.mubr.f32.gmra.mxu0 %v654
  %v732 = vpop.f32.mrf.mxu0
  %v733 = vadd.f32 0.0, %v732
  %v734 = vpop.f32.mrf.mxu0
  %735 = vmatprep.mubr.f32.mxu0 0.0
  %736 = vmatmul.mubr.f32.gmra.mxu0 %v655
  %v737 = vpop.f32.mrf.mxu0
  %v738 = vadd.f32 0.0, %v737
  %v739 = vpop.f32.mrf.mxu0
  %740 = vdwg.mxu0
  %v741 = vadd.f32 %v723, %v728
  %v742 = vadd.f32 %v741, %v733
  %v743 = vadd.f32 %v742, %v738
  %v744 = vrot.slane %v743, 4
  %v745 = vadd.f32 %v743, %v744
  %v746 = vrot.slane %v745, 2
  %v747 = vadd.f32 %v745, %v746
  %v748 = vrot.slane %v747, 1
  %v749 = vadd.f32 %v747, %v748
  %v750 = vmul.f32 %v651, 0.001953125
  %v751 = vmul.f32 %v749, 0.001953125
  %v752 = vmul.f32 %v750, %v750
  %v753 = vsub.f32 %v751, %v752
  %v754 = vmax.f32 %v753, 0.0
  %v755 = vadd.f32 %v754, 1e-05
  %v756 = vrsqrt.pop %v755
  %v757 = vmul.f32 %v556, %v756
  %v758 = vmul.f32 %v750, %v757
  %v759 = vsub.f32 %v557, %v758
  %v761 = vlaneseq
  %v762 = vshrl.u32 %v761, 7
  %v763 = vsub.s32 0, %v762
  %v764 = vrot.slane %v757, %v763
  %v766 = vmul.f32 %v552, %v764
  %v767 = vmul.f32 %v553, %v764
  %v768 = vmul.f32 %v554, %v764
  %v769 = vmul.f32 %v555, %v764
  %v771 = vlaneseq
  %v772 = vshrl.u32 %v771, 7
  %v773 = vsub.s32 0, %v772
  %v774 = vrot.slane %v759, %v773
  %v776 = vadd.f32 %v766, %v774
  %v777 = vadd.f32 %v767, %v774
  %v778 = vadd.f32 %v768, %v774
  %v779 = vadd.f32 %v769, %v774
  %v780 = vmax.f32 %v776, 0.0
  %v781 = vmax.f32 %v777, 0.0
  %v782 = vmax.f32 %v778, 0.0
  %v783 = vmax.f32 %v779, 0.0
  %v784 = vld [vmem:[%s2] sm:$0xff]
  %v785 = vld [vmem:[%s2 + $0x8] sm:$0xff]
  %v786 = vld [vmem:[%s2 + $0x10] sm:$0xff]
  %v787 = vld [vmem:[%s2 + $0x18] sm:$0xff]
  %v788 = vld [vmem:[%s2 + $0x20] sm:$0xff]
  %v789 = vld [vmem:[%s2 + $0x28] sm:$0xff]
  %v790 = vld [vmem:[%s2 + $0x30] sm:$0xff]
  %v791 = vld [vmem:[%s2 + $0x38] sm:$0xff]
  %v792 = vld [vmem:[%s2 + $0x40] sm:$0xff]
  %v793 = vld [vmem:[%s2 + $0x48] sm:$0xff]
  %v794 = vld [vmem:[%s2 + $0x50] sm:$0xff]
  %v795 = vld [vmem:[%s2 + $0x58] sm:$0xff]
  %v796 = vld [vmem:[%s2 + $0x60] sm:$0xff]
  %v797 = vld [vmem:[%s2 + $0x68] sm:$0xff]
  %v798 = vld [vmem:[%s2 + $0x70] sm:$0xff]
  %v799 = vld [vmem:[%s2 + $0x78] sm:$0xff]
  %800 = vmatprep.subr.mxu0 0.0
  %801 = vmatpush1.msra.mxu0 %v799
  %802 = vmatprep.subr.mxu0 0.0
  %803 = vmatpush1.msra.mxu0 %v798
  %804 = vmatprep.subr.mxu0 0.0
  %805 = vmatpush1.msra.mxu0 %v797
  %806 = vmatprep.subr.mxu0 0.0
  %807 = vmatpush1.msra.mxu0 %v796
  %808 = vmatprep.subr.mxu0 0.0
  %809 = vmatpush1.msra.mxu0 %v795
  %810 = vmatprep.subr.mxu0 0.0
  %811 = vmatpush1.msra.mxu0 %v794
  %812 = vmatprep.subr.mxu0 0.0
  %813 = vmatpush1.msra.mxu0 %v793
  %814 = vmatprep.subr.mxu0 0.0
  %815 = vmatpush1.msra.mxu0 %v792
  %816 = vmatprep.subr.mxu0 0.0
  %817 = vmatpush1.msra.mxu0 %v791
  %818 = vmatprep.subr.mxu0 0.0
  %819 = vmatpush1.msra.mxu0 %v790
  %820 = vmatprep.subr.mxu0 0.0
  %821 = vmatpush1.msra.mxu0 %v789
  %822 = vmatprep.subr.mxu0 0.0
  %823 = vmatpush1.msra.mxu0 %v788
  %824 = vmatprep.subr.mxu0 0.0
  %825 = vmatpush1.msra.mxu0 %v787
  %826 = vmatprep.subr.mxu0 0.0
  %827 = vmatpush1.msra.mxu0 %v786
  %828 = vmatprep.subr.mxu0 0.0
  %829 = vmatpush1.msra.mxu0 %v785
  %830 = vmatprep.subr.mxu0 0.0
  %831 = vmatpush1.msra.mxu0 %v784
  %832 = vmatprep.subr.mxu0 0.0
  %833 = vmatpush2.msra.mxu0 0.0
  %834 = vmatprep.subr.mxu0 0.0
  %835 = vmatpush2.msra.mxu0 0.0
  %836 = vmatprep.subr.mxu0 0.0
  %837 = vmatpush2.msra.mxu0 0.0
  %838 = vmatprep.subr.mxu0 0.0
  %839 = vmatpush2.msra.mxu0 0.0
  %840 = vmatprep.subr.mxu0 0.0
  %841 = vmatpush2.msra.mxu0 0.0
  %842 = vmatprep.subr.mxu0 0.0
  %843 = vmatpush2.msra.mxu0 0.0
  %844 = vmatprep.subr.mxu0 0.0
  %845 = vmatpush2.msra.mxu0 0.0
  %846 = vmatprep.subr.mxu0 0.0
  %847 = vmatpush2.msra.mxu0 0.0
  %848 = vmatprep.subr.mxu0 0.0
  %849 = vmatpush2.msra.mxu0 0.0
  %850 = vmatprep.subr.mxu0 0.0
  %851 = vmatpush2.msra.mxu0 0.0
  %852 = vmatprep.subr.mxu0 0.0
  %853 = vmatpush2.msra.mxu0 0.0
  %854 = vmatprep.subr.mxu0 0.0
  %855 = vmatpush2.msra.mxu0 0.0
  %856 = vmatprep.subr.mxu0 0.0
  %857 = vmatpush2.msra.mxu0 0.0
  %858 = vmatprep.subr.mxu0 0.0
  %859 = vmatpush2.msra.mxu0 0.0
  %860 = vmatprep.subr.mxu0 0.0
  %861 = vmatpush2.msra.mxu0 0.0
  %862 = vmatprep.subr.mxu0 0.0
  %863 = vmatpush2.msra.mxu0 0.0
  %864 = vmatprep.mubr.f32.mxu0 0.0
  %865 = vmatmul.mubr.f32.gmra.mxu0 %v780
  %v866 = vpop.f32.mrf.mxu0
  %v867 = vadd.f32 0.0, %v866
  %v868 = vpop.f32.mrf.mxu0
  %869 = vmatprep.mubr.f32.mxu0 0.0
  %870 = vmatmul.mubr.f32.gmra.mxu0 %v781
  %v871 = vpop.f32.mrf.mxu0
  %v872 = vadd.f32 0.0, %v871
  %v873 = vpop.f32.mrf.mxu0
  %874 = vmatprep.mubr.f32.mxu0 0.0
  %875 = vmatmul.mubr.f32.gmra.mxu0 %v782
  %v876 = vpop.f32.mrf.mxu0
  %v877 = vadd.f32 0.0, %v876
  %v878 = vpop.f32.mrf.mxu0
  %879 = vmatprep.mubr.f32.mxu0 0.0
  %880 = vmatmul.mubr.f32.gmra.mxu0 %v783
  %v881 = vpop.f32.mrf.mxu0
  %v882 = vadd.f32 0.0, %v881
  %v883 = vpop.f32.mrf.mxu0
  %884 = vdwg.mxu0
  %s885 = scalar_lea.vmem %s2, 128
  %v886 = vld [vmem:[%s885] sm:$0xff]
  %v887 = vld [vmem:[%s885 + $0x8] sm:$0xff]
  %v888 = vld [vmem:[%s885 + $0x10] sm:$0xff]
  %v889 = vld [vmem:[%s885 + $0x18] sm:$0xff]
  %v890 = vld [vmem:[%s885 + $0x20] sm:$0xff]
  %v891 = vld [vmem:[%s885 + $0x28] sm:$0xff]
  %v892 = vld [vmem:[%s885 + $0x30] sm:$0xff]
  %v893 = vld [vmem:[%s885 + $0x38] sm:$0xff]
  %v894 = vld [vmem:[%s885 + $0x40] sm:$0xff]
  %v895 = vld [vmem:[%s885 + $0x48] sm:$0xff]
  %v896 = vld [vmem:[%s885 + $0x50] sm:$0xff]
  %v897 = vld [vmem:[%s885 + $0x58] sm:$0xff]
  %v898 = vld [vmem:[%s885 + $0x60] sm:$0xff]
  %v899 = vld [vmem:[%s885 + $0x68] sm:$0xff]
  %v900 = vld [vmem:[%s885 + $0x70] sm:$0xff]
  %v901 = vld [vmem:[%s885 + $0x78] sm:$0xff]
  %902 = vmatprep.subr.mxu0 0.0
  %903 = vmatpush1.msra.mxu0 %v901
  %904 = vmatprep.subr.mxu0 0.0
  %905 = vmatpush1.msra.mxu0 %v900
  %906 = vmatprep.subr.mxu0 0.0
  %907 = vmatpush1.msra.mxu0 %v899
  %908 = vmatprep.subr.mxu0 0.0
  %909 = vmatpush1.msra.mxu0 %v898
  %910 = vmatprep.subr.mxu0 0.0
  %911 = vmatpush1.msra.mxu0 %v897
  %912 = vmatprep.subr.mxu0 0.0
  %913 = vmatpush1.msra.mxu0 %v896
  %914 = vmatprep.subr.mxu0 0.0
  %915 = vmatpush1.msra.mxu0 %v895
  %916 = vmatprep.subr.mxu0 0.0
  %917 = vmatpush1.msra.mxu0 %v894
  %918 = vmatprep.subr.mxu0 0.0
  %919 = vmatpush1.msra.mxu0 %v893
  %920 = vmatprep.subr.mxu0 0.0
  %921 = vmatpush1.msra.mxu0 %v892
  %922 = vmatprep.subr.mxu0 0.0
  %923 = vmatpush1.msra.mxu0 %v891
  %924 = vmatprep.subr.mxu0 0.0
  %925 = vmatpush1.msra.mxu0 %v890
  %926 = vmatprep.subr.mxu0 0.0
  %927 = vmatpush1.msra.mxu0 %v889
  %928 = vmatprep.subr.mxu0 0.0
  %929 = vmatpush1.msra.mxu0 %v888
  %930 = vmatprep.subr.mxu0 0.0
  %931 = vmatpush1.msra.mxu0 %v887
  %932 = vmatprep.subr.mxu0 0.0
  %933 = vmatpush1.msra.mxu0 %v886
  %934 = vmatprep.subr.mxu0 0.0
  %935 = vmatpush2.msra.mxu0 0.0
  %936 = vmatprep.subr.mxu0 0.0
  %937 = vmatpush2.msra.mxu0 0.0
  %938 = vmatprep.subr.mxu0 0.0
  %939 = vmatpush2.msra.mxu0 0.0
  %940 = vmatprep.subr.mxu0 0.0
  %941 = vmatpush2.msra.mxu0 0.0
  %942 = vmatprep.subr.mxu0 0.0
  %943 = vmatpush2.msra.mxu0 0.0
  %944 = vmatprep.subr.mxu0 0.0
  %945 = vmatpush2.msra.mxu0 0.0
  %946 = vmatprep.subr.mxu0 0.0
  %947 = vmatpush2.msra.mxu0 0.0
  %948 = vmatprep.subr.mxu0 0.0
  %949 = vmatpush2.msra.mxu0 0.0
  %950 = vmatprep.subr.mxu0 0.0
  %951 = vmatpush2.msra.mxu0 0.0
  %952 = vmatprep.subr.mxu0 0.0
  %953 = vmatpush2.msra.mxu0 0.0
  %954 = vmatprep.subr.mxu0 0.0
  %955 = vmatpush2.msra.mxu0 0.0
  %956 = vmatprep.subr.mxu0 0.0
  %957 = vmatpush2.msra.mxu0 0.0
  %958 = vmatprep.subr.mxu0 0.0
  %959 = vmatpush2.msra.mxu0 0.0
  %960 = vmatprep.subr.mxu0 0.0
  %961 = vmatpush2.msra.mxu0 0.0
  %962 = vmatprep.subr.mxu0 0.0
  %963 = vmatpush2.msra.mxu0 0.0
  %964 = vmatprep.subr.mxu0 0.0
  %965 = vmatpush2.msra.mxu0 0.0
  %966 = vmatprep.mubr.f32.mxu0 0.0
  %967 = vmatmul.mubr.f32.gmra.mxu0 %v780
  %v968 = vpop.f32.mrf.mxu0
  %v969 = vadd.f32 0.0, %v968
  %v970 = vpop.f32.mrf.mxu0
  %971 = vmatprep.mubr.f32.mxu0 0.0
  %972 = vmatmul.mubr.f32.gmra.mxu0 %v781
  %v973 = vpop.f32.mrf.mxu0
  %v974 = vadd.f32 0.0, %v973
  %v975 = vpop.f32.mrf.mxu0
  %976 = vmatprep.mubr.f32.mxu0 0.0
  %977 = vmatmul.mubr.f32.gmra.mxu0 %v782
  %v978 = vpop.f32.mrf.mxu0
  %v979 = vadd.f32 0.0, %v978
  %v980 = vpop.f32.mrf.mxu0
  %981 = vmatprep.mubr.f32.mxu0 0.0
  %982 = vmatmul.mubr.f32.gmra.mxu0 %v783
  %v983 = vpop.f32.mrf.mxu0
  %v984 = vadd.f32 0.0, %v983
  %v985 = vpop.f32.mrf.mxu0
  %986 = vdwg.mxu0
  %s987 = scalar_lea.vmem %s2, 256
  %v988 = vld [vmem:[%s987] sm:$0xff]
  %v989 = vld [vmem:[%s987 + $0x8] sm:$0xff]
  %v990 = vld [vmem:[%s987 + $0x10] sm:$0xff]
  %v991 = vld [vmem:[%s987 + $0x18] sm:$0xff]
  %v992 = vld [vmem:[%s987 + $0x20] sm:$0xff]
  %v993 = vld [vmem:[%s987 + $0x28] sm:$0xff]
  %v994 = vld [vmem:[%s987 + $0x30] sm:$0xff]
  %v995 = vld [vmem:[%s987 + $0x38] sm:$0xff]
  %v996 = vld [vmem:[%s987 + $0x40] sm:$0xff]
  %v997 = vld [vmem:[%s987 + $0x48] sm:$0xff]
  %v998 = vld [vmem:[%s987 + $0x50] sm:$0xff]
  %v999 = vld [vmem:[%s987 + $0x58] sm:$0xff]
  %v1000 = vld [vmem:[%s987 + $0x60] sm:$0xff]
  %v1001 = vld [vmem:[%s987 + $0x68] sm:$0xff]
  %v1002 = vld [vmem:[%s987 + $0x70] sm:$0xff]
  %v1003 = vld [vmem:[%s987 + $0x78] sm:$0xff]
  %1004 = vmatprep.subr.mxu0 0.0
  %1005 = vmatpush1.msra.mxu0 %v1003
  %1006 = vmatprep.subr.mxu0 0.0
  %1007 = vmatpush1.msra.mxu0 %v1002
  %1008 = vmatprep.subr.mxu0 0.0
  %1009 = vmatpush1.msra.mxu0 %v1001
  %1010 = vmatprep.subr.mxu0 0.0
  %1011 = vmatpush1.msra.mxu0 %v1000
  %1012 = vmatprep.subr.mxu0 0.0
  %1013 = vmatpush1.msra.mxu0 %v999
  %1014 = vmatprep.subr.mxu0 0.0
  %1015 = vmatpush1.msra.mxu0 %v998
  %1016 = vmatprep.subr.mxu0 0.0
  %1017 = vmatpush1.msra.mxu0 %v997
  %1018 = vmatprep.subr.mxu0 0.0
  %1019 = vmatpush1.msra.mxu0 %v996
  %1020 = vmatprep.subr.mxu0 0.0
  %1021 = vmatpush1.msra.mxu0 %v995
  %1022 = vmatprep.subr.mxu0 0.0
  %1023 = vmatpush1.msra.mxu0 %v994
  %1024 = vmatprep.subr.mxu0 0.0
  %1025 = vmatpush1.msra.mxu0 %v993
  %1026 = vmatprep.subr.mxu0 0.0
  %1027 = vmatpush1.msra.mxu0 %v992
  %1028 = vmatprep.subr.mxu0 0.0
  %1029 = vmatpush1.msra.mxu0 %v991
  %1030 = vmatprep.subr.mxu0 0.0
  %1031 = vmatpush1.msra.mxu0 %v990
  %1032 = vmatprep.subr.mxu0 0.0
  %1033 = vmatpush1.msra.mxu0 %v989
  %1034 = vmatprep.subr.mxu0 0.0
  %1035 = vmatpush1.msra.mxu0 %v988
  %1036 = vmatprep.subr.mxu0 0.0
  %1037 = vmatpush2.msra.mxu0 0.0
  %1038 = vmatprep.subr.mxu0 0.0
  %1039 = vmatpush2.msra.mxu0 0.0
  %1040 = vmatprep.subr.mxu0 0.0
  %1041 = vmatpush2.msra.mxu0 0.0
  %1042 = vmatprep.subr.mxu0 0.0
  %1043 = vmatpush2.msra.mxu0 0.0
  %1044 = vmatprep.subr.mxu0 0.0
  %1045 = vmatpush2.msra.mxu0 0.0
  %1046 = vmatprep.subr.mxu0 0.0
  %1047 = vmatpush2.msra.mxu0 0.0
  %1048 = vmatprep.subr.mxu0 0.0
  %1049 = vmatpush2.msra.mxu0 0.0
  %1050 = vmatprep.subr.mxu0 0.0
  %1051 = vmatpush2.msra.mxu0 0.0
  %1052 = vmatprep.subr.mxu0 0.0
  %1053 = vmatpush2.msra.mxu0 0.0
  %1054 = vmatprep.subr.mxu0 0.0
  %1055 = vmatpush2.msra.mxu0 0.0
  %1056 = vmatprep.subr.mxu0 0.0
  %1057 = vmatpush2.msra.mxu0 0.0
  %1058 = vmatprep.subr.mxu0 0.0
  %1059 = vmatpush2.msra.mxu0 0.0
  %1060 = vmatprep.subr.mxu0 0.0
  %1061 = vmatpush2.msra.mxu0 0.0
  %1062 = vmatprep.subr.mxu0 0.0
  %1063 = vmatpush2.msra.mxu0 0.0
  %1064 = vmatprep.subr.mxu0 0.0
  %1065 = vmatpush2.msra.mxu0 0.0
  %1066 = vmatprep.subr.mxu0 0.0
  %1067 = vmatpush2.msra.mxu0 0.0
  %1068 = vmatprep.mubr.f32.mxu0 0.0
  %1069 = vmatmul.mubr.f32.gmra.mxu0 %v780
  %v1070 = vpop.f32.mrf.mxu0
  %v1071 = vadd.f32 0.0, %v1070
  %v1072 = vpop.f32.mrf.mxu0
  %1073 = vmatprep.mubr.f32.mxu0 0.0
  %1074 = vmatmul.mubr.f32.gmra.mxu0 %v781
  %v1075 = vpop.f32.mrf.mxu0
  %v1076 = vadd.f32 0.0, %v1075
  %v1077 = vpop.f32.mrf.mxu0
  %1078 = vmatprep.mubr.f32.mxu0 0.0
  %1079 = vmatmul.mubr.f32.gmra.mxu0 %v782
  %v1080 = vpop.f32.mrf.mxu0
  %v1081 = vadd.f32 0.0, %v1080
  %v1082 = vpop.f32.mrf.mxu0
  %1083 = vmatprep.mubr.f32.mxu0 0.0
  %1084 = vmatmul.mubr.f32.gmra.mxu0 %v783
  %v1085 = vpop.f32.mrf.mxu0
  %v1086 = vadd.f32 0.0, %v1085
  %v1087 = vpop.f32.mrf.mxu0
  %1088 = vdwg.mxu0
  %1089 = vmatprep.subr.mxu0 0.0
  %1090 = vmatpush1.msra.mxu0 0.0
  %1091 = vmatprep.subr.mxu0 0.0
  %1092 = vmatpush1.msra.mxu0 0.0
  %1093 = vmatprep.subr.mxu0 0.0
  %1094 = vmatpush1.msra.mxu0 0.0
  %1095 = vmatprep.subr.mxu0 0.0
  %1096 = vmatpush1.msra.mxu0 0.0
  %1097 = vmatprep.subr.mxu0 0.0
  %1098 = vmatpush1.msra.mxu0 0.0
  %1099 = vmatprep.subr.mxu0 0.0
  %1100 = vmatpush1.msra.mxu0 0.0
  %1101 = vmatprep.subr.mxu0 0.0
  %1102 = vmatpush1.msra.mxu0 0.0
  %1103 = vmatprep.subr.mxu0 0.0
  %1104 = vmatpush1.msra.mxu0 0.0
  %1105 = vmatprep.subr.mxu0 0.0
  %1106 = vmatpush1.msra.mxu0 0.0
  %1107 = vmatprep.subr.mxu0 0.0
  %1108 = vmatpush1.msra.mxu0 0.0
  %1109 = vmatprep.subr.mxu0 0.0
  %1110 = vmatpush1.msra.mxu0 0.0
  %1111 = vmatprep.subr.mxu0 0.0
  %1112 = vmatpush1.msra.mxu0 0.0
  %1113 = vmatprep.subr.mxu0 0.0
  %1114 = vmatpush1.msra.mxu0 %v882
  %1115 = vmatprep.subr.mxu0 0.0
  %1116 = vmatpush1.msra.mxu0 %v877
  %1117 = vmatprep.subr.mxu0 0.0
  %1118 = vmatpush1.msra.mxu0 %v872
  %1119 = vmatprep.subr.mxu0 0.0
  %1120 = vmatpush1.msra.mxu0 %v867
  %1121 = vmatprep.subr.mxu0 0.0
  %1122 = vmatpush2.msra.mxu0 0.0
  %1123 = vmatprep.subr.mxu0 0.0
  %1124 = vmatpush2.msra.mxu0 0.0
  %1125 = vmatprep.subr.mxu0 0.0
  %1126 = vmatpush2.msra.mxu0 0.0
  %1127 = vmatprep.subr.mxu0 0.0
  %1128 = vmatpush2.msra.mxu0 0.0
  %1129 = vmatprep.subr.mxu0 0.0
  %1130 = vmatpush2.msra.mxu0 0.0
  %1131 = vmatprep.subr.mxu0 0.0
  %1132 = vmatpush2.msra.mxu0 0.0
  %1133 = vmatprep.subr.mxu0 0.0
  %1134 = vmatpush2.msra.mxu0 0.0
  %1135 = vmatprep.subr.mxu0 0.0
  %1136 = vmatpush2.msra.mxu0 0.0
  %1137 = vmatprep.subr.mxu0 0.0
  %1138 = vmatpush2.msra.mxu0 0.0
  %1139 = vmatprep.subr.mxu0 0.0
  %1140 = vmatpush2.msra.mxu0 0.0
  %1141 = vmatprep.subr.mxu0 0.0
  %1142 = vmatpush2.msra.mxu0 0.0
  %1143 = vmatprep.subr.mxu0 0.0
  %1144 = vmatpush2.msra.mxu0 0.0
  %1145 = vmatprep.subr.mxu0 0.0
  %1146 = vmatpush2.msra.mxu0 0.0
  %1147 = vmatprep.subr.mxu0 0.0
  %1148 = vmatpush2.msra.mxu0 0.0
  %1149 = vmatprep.subr.mxu0 0.0
  %1150 = vmatpush2.msra.mxu0 0.0
  %1151 = vmatprep.subr.mxu0 0.0
  %1152 = vmatpush2.msra.mxu0 0.0
  %1153 = vmatprep.mubr.f32.mxu0 0.0
  %1154 = vmatmul.mubr.f32.gmra.mxu0 %v359
  %v1155 = vpop.f32.mrf.mxu0
  %v1156 = vadd.f32 %v969, %v1155
  %v1157 = vpop.f32.mrf.mxu0
  %1158 = vmatprep.mubr.f32.mxu0 0.0
  %1159 = vmatmul.mubr.f32.gmra.mxu0 %v362
  %v1160 = vpop.f32.mrf.mxu0
  %v1161 = vadd.f32 %v974, %v1160
  %v1162 = vpop.f32.mrf.mxu0
  %1163 = vmatprep.mubr.f32.mxu0 0.0
  %1164 = vmatmul.mubr.f32.gmra.mxu0 %v365
  %v1165 = vpop.f32.mrf.mxu0
  %v1166 = vadd.f32 %v979, %v1165
  %v1167 = vpop.f32.mrf.mxu0
  %1168 = vmatprep.mubr.f32.mxu0 0.0
  %1169 = vmatmul.mubr.f32.gmra.mxu0 %v368
  %v1170 = vpop.f32.mrf.mxu0
  %v1171 = vadd.f32 %v984, %v1170
  %v1172 = vpop.f32.mrf.mxu0
  %1173 = vdwg.mxu0
  %1174 = vmatprep.subr.mxu0 0.0
  %1175 = vmatpush1.msra.mxu0 0.0
  %1176 = vmatprep.subr.mxu0 0.0
  %1177 = vmatpush1.msra.mxu0 0.0
  %1178 = vmatprep.subr.mxu0 0.0
  %1179 = vmatpush1.msra.mxu0 0.0
  %1180 = vmatprep.subr.mxu0 0.0
  %1181 = vmatpush1.msra.mxu0 0.0
  %1182 = vmatprep.subr.mxu0 0.0
  %1183 = vmatpush1.msra.mxu0 0.0
  %1184 = vmatprep.subr.mxu0 0.0
  %1185 = vmatpush1.msra.mxu0 0.0
  %1186 = vmatprep.subr.mxu0 0.0
  %1187 = vmatpush1.msra.mxu0 0.0
  %1188 = vmatprep.subr.mxu0 0.0
  %1189 = vmatpush1.msra.mxu0 0.0
  %1190 = vmatprep.subr.mxu0 0.0
  %1191 = vmatpush1.msra.mxu0 0.0
  %1192 = vmatprep.subr.mxu0 0.0
  %1193 = vmatpush1.msra.mxu0 0.0
  %1194 = vmatprep.subr.mxu0 0.0
  %1195 = vmatpush1.msra.mxu0 0.0
  %1196 = vmatprep.subr.mxu0 0.0
  %1197 = vmatpush1.msra.mxu0 0.0
  %1198 = vmatprep.subr.mxu0 0.0
  %1199 = vmatpush1.msra.mxu0 %v1086
  %1200 = vmatprep.subr.mxu0 0.0
  %1201 = vmatpush1.msra.mxu0 %v1081
  %1202 = vmatprep.subr.mxu0 0.0
  %1203 = vmatpush1.msra.mxu0 %v1076
  %1204 = vmatprep.subr.mxu0 0.0
  %1205 = vmatpush1.msra.mxu0 %v1071
  %1206 = vmatprep.subr.mxu0 0.0
  %1207 = vmatpush2.msra.mxu0 0.0
  %1208 = vmatprep.subr.mxu0 0.0
  %1209 = vmatpush2.msra.mxu0 0.0
  %1210 = vmatprep.subr.mxu0 0.0
  %1211 = vmatpush2.msra.mxu0 0.0
  %1212 = vmatprep.subr.mxu0 0.0
  %1213 = vmatpush2.msra.mxu0 0.0
  %1214 = vmatprep.subr.mxu0 0.0
  %1215 = vmatpush2.msra.mxu0 0.0
  %1216 = vmatprep.subr.mxu0 0.0
  %1217 = vmatpush2.msra.mxu0 0.0
  %1218 = vmatprep.subr.mxu0 0.0
  %1219 = vmatpush2.msra.mxu0 0.0
  %1220 = vmatprep.subr.mxu0 0.0
  %1221 = vmatpush2.msra.mxu0 0.0
  %1222 = vmatprep.subr.mxu0 0.0
  %1223 = vmatpush2.msra.mxu0 0.0
  %1224 = vmatprep.subr.mxu0 0.0
  %1225 = vmatpush2.msra.mxu0 0.0
  %1226 = vmatprep.subr.mxu0 0.0
  %1227 = vmatpush2.msra.mxu0 0.0
  %1228 = vmatprep.subr.mxu0 0.0
  %1229 = vmatpush2.msra.mxu0 0.0
  %1230 = vmatprep.subr.mxu0 0.0
  %1231 = vmatpush2.msra.mxu0 0.0
  %1232 = vmatprep.subr.mxu0 0.0
  %1233 = vmatpush2.msra.mxu0 0.0
  %1234 = vmatprep.subr.mxu0 0.0
  %1235 = vmatpush2.msra.mxu0 0.0
  %1236 = vmatprep.subr.mxu0 0.0
  %1237 = vmatpush2.msra.mxu0 0.0
  %1238 = vmatprep.mubr.f32.mxu0 0.0
  %1239 = vmatmul.mubr.f32.gmra.mxu0 %v456
  %v1240 = vpop.f32.mrf.mxu0
  %v1241 = vadd.f32 0.0, %v1240
  %v1242 = vpop.f32.mrf.mxu0
  %1243 = vmatprep.mubr.f32.mxu0 0.0
  %1244 = vmatmul.mubr.f32.gmra.mxu0 %v459
  %v1245 = vpop.f32.mrf.mxu0
  %v1246 = vadd.f32 0.0, %v1245
  %v1247 = vpop.f32.mrf.mxu0
  %1248 = vmatprep.mubr.f32.mxu0 0.0
  %1249 = vmatmul.mubr.f32.gmra.mxu0 %v462
  %v1250 = vpop.f32.mrf.mxu0
  %v1251 = vadd.f32 0.0, %v1250
  %v1252 = vpop.f32.mrf.mxu0
  %1253 = vmatprep.mubr.f32.mxu0 0.0
  %1254 = vmatmul.mubr.f32.gmra.mxu0 %v465
  %v1255 = vpop.f32.mrf.mxu0
  %v1256 = vadd.f32 0.0, %v1255
  %v1257 = vpop.f32.mrf.mxu0
  %1258 = vdwg.mxu0
  %v1259 = vadd.f32 %v1156, %v1241
  %v1260 = vadd.f32 %v1161, %v1246
  %v1261 = vadd.f32 %v1166, %v1251
  %v1262 = vadd.f32 %v1171, %v1256
  %v1263 = vld [vmem:[%s8] sm:$0x1]
  %v1264 = vld [vmem:[%s9] sm:$0x1]
  %1265 = vmatprep.subr.mxu0 0.0
  %1266 = vmatpush1.msra.mxu0 %v58
  %1267 = vmatprep.subr.mxu0 0.0
  %1268 = vmatpush1.msra.mxu0 %v57
  %1269 = vmatprep.subr.mxu0 0.0
  %1270 = vmatpush1.msra.mxu0 %v56
  %1271 = vmatprep.subr.mxu0 0.0
  %1272 = vmatpush1.msra.mxu0 %v55
  %1273 = vmatprep.subr.mxu0 0.0
  %1274 = vmatpush1.msra.mxu0 %v54
  %1275 = vmatprep.subr.mxu0 0.0
  %1276 = vmatpush1.msra.mxu0 %v53
  %1277 = vmatprep.subr.mxu0 0.0
  %1278 = vmatpush1.msra.mxu0 %v52
  %1279 = vmatprep.subr.mxu0 0.0
  %1280 = vmatpush1.msra.mxu0 %v51
  %1281 = vmatprep.subr.mxu0 0.0
  %1282 = vmatpush1.msra.mxu0 %v50
  %1283 = vmatprep.subr.mxu0 0.0
  %1284 = vmatpush1.msra.mxu0 %v49
  %1285 = vmatprep.subr.mxu0 0.0
  %1286 = vmatpush1.msra.mxu0 %v48
  %1287 = vmatprep.subr.mxu0 0.0
  %1288 = vmatpush1.msra.mxu0 %v47
  %1289 = vmatprep.subr.mxu0 0.0
  %1290 = vmatpush1.msra.mxu0 %v46
  %1291 = vmatprep.subr.mxu0 0.0
  %1292 = vmatpush1.msra.mxu0 %v45
  %1293 = vmatprep.subr.mxu0 0.0
  %1294 = vmatpush1.msra.mxu0 %v44
  %1295 = vmatprep.subr.mxu0 0.0
  %1296 = vmatpush1.msra.mxu0 %v43
  %1297 = vmatprep.subr.mxu0 0.0
  %1298 = vmatpush2.msra.mxu0 0.0
  %1299 = vmatprep.subr.mxu0 0.0
  %1300 = vmatpush2.msra.mxu0 0.0
  %1301 = vmatprep.subr.mxu0 0.0
  %1302 = vmatpush2.msra.mxu0 0.0
  %1303 = vmatprep.subr.mxu0 0.0
  %1304 = vmatpush2.msra.mxu0 0.0
  %1305 = vmatprep.subr.mxu0 0.0
  %1306 = vmatpush2.msra.mxu0 0.0
  %1307 = vmatprep.subr.mxu0 0.0
  %1308 = vmatpush2.msra.mxu0 0.0
  %1309 = vmatprep.subr.mxu0 0.0
  %1310 = vmatpush2.msra.mxu0 0.0
  %1311 = vmatprep.subr.mxu0 0.0
  %1312 = vmatpush2.msra.mxu0 0.0
  %1313 = vmatprep.subr.mxu0 0.0
  %1314 = vmatpush2.msra.mxu0 0.0
  %1315 = vmatprep.subr.mxu0 0.0
  %1316 = vmatpush2.msra.mxu0 0.0
  %1317 = vmatprep.subr.mxu0 0.0
  %1318 = vmatpush2.msra.mxu0 0.0
  %1319 = vmatprep.subr.mxu0 0.0
  %1320 = vmatpush2.msra.mxu0 0.0
  %1321 = vmatprep.subr.mxu0 0.0
  %1322 = vmatpush2.msra.mxu0 0.0
  %1323 = vmatprep.subr.mxu0 0.0
  %1324 = vmatpush2.msra.mxu0 0.0
  %1325 = vmatprep.subr.mxu0 0.0
  %1326 = vmatpush2.msra.mxu0 0.0
  %1327 = vmatprep.subr.mxu0 0.0
  %1328 = vmatpush2.msra.mxu0 0.0
  %1329 = vmatprep.mubr.f32.mxu0 0.0
  %1330 = vmatmul.mubr.f32.gmra.mxu0 %v1259
  %v1331 = vpop.f32.mrf.mxu0
  %v1332 = vadd.f32 0.0, %v1331
  %v1333 = vpop.f32.mrf.mxu0
  %1334 = vmatprep.mubr.f32.mxu0 0.0
  %1335 = vmatmul.mubr.f32.gmra.mxu0 %v1260
  %v1336 = vpop.f32.mrf.mxu0
  %v1337 = vadd.f32 0.0, %v1336
  %v1338 = vpop.f32.mrf.mxu0
  %1339 = vmatprep.mubr.f32.mxu0 0.0
  %1340 = vmatmul.mubr.f32.gmra.mxu0 %v1261
  %v1341 = vpop.f32.mrf.mxu0
  %v1342 = vadd.f32 0.0, %v1341
  %v1343 = vpop.f32.mrf.mxu0
  %1344 = vmatprep.mubr.f32.mxu0 0.0
  %1345 = vmatmul.mubr.f32.gmra.mxu0 %v1262
  %v1346 = vpop.f32.mrf.mxu0
  %v1347 = vadd.f32 0.0, %v1346
  %v1348 = vpop.f32.mrf.mxu0
  %1349 = vdwg.mxu0
  %v1350 = vadd.f32 %v1332, %v1337
  %v1351 = vadd.f32 %v1350, %v1342
  %v1352 = vadd.f32 %v1351, %v1347
  %v1353 = vrot.slane %v1352, 4
  %v1354 = vadd.f32 %v1352, %v1353
  %v1355 = vrot.slane %v1354, 2
  %v1356 = vadd.f32 %v1354, %v1355
  %v1357 = vrot.slane %v1356, 1
  %v1358 = vadd.f32 %v1356, %v1357
  %v1359 = vmul.f32 %v1259, %v1259
  %v1360 = vmul.f32 %v1260, %v1260
  %v1361 = vmul.f32 %v1261, %v1261
  %v1362 = vmul.f32 %v1262, %v1262
  %1363 = vmatprep.subr.mxu0 0.0
  %1364 = vmatpush1.msra.mxu0 %v58
  %1365 = vmatprep.subr.mxu0 0.0
  %1366 = vmatpush1.msra.mxu0 %v57
  %1367 = vmatprep.subr.mxu0 0.0
  %1368 = vmatpush1.msra.mxu0 %v56
  %1369 = vmatprep.subr.mxu0 0.0
  %1370 = vmatpush1.msra.mxu0 %v55
  %1371 = vmatprep.subr.mxu0 0.0
  %1372 = vmatpush1.msra.mxu0 %v54
  %1373 = vmatprep.subr.mxu0 0.0
  %1374 = vmatpush1.msra.mxu0 %v53
  %1375 = vmatprep.subr.mxu0 0.0
  %1376 = vmatpush1.msra.mxu0 %v52
  %1377 = vmatprep.subr.mxu0 0.0
  %1378 = vmatpush1.msra.mxu0 %v51
  %1379 = vmatprep.subr.mxu0 0.0
  %1380 = vmatpush1.msra.mxu0 %v50
  %1381 = vmatprep.subr.mxu0 0.0
  %1382 = vmatpush1.msra.mxu0 %v49
  %1383 = vmatprep.subr.mxu0 0.0
  %1384 = vmatpush1.msra.mxu0 %v48
  %1385 = vmatprep.subr.mxu0 0.0
  %1386 = vmatpush1.msra.mxu0 %v47
  %1387 = vmatprep.subr.mxu0 0.0
  %1388 = vmatpush1.msra.mxu0 %v46
  %1389 = vmatprep.subr.mxu0 0.0
  %1390 = vmatpush1.msra.mxu0 %v45
  %1391 = vmatprep.subr.mxu0 0.0
  %1392 = vmatpush1.msra.mxu0 %v44
  %1393 = vmatprep.subr.mxu0 0.0
  %1394 = vmatpush1.msra.mxu0 %v43
  %1395 = vmatprep.subr.mxu0 0.0
  %1396 = vmatpush2.msra.mxu0 0.0
  %1397 = vmatprep.subr.mxu0 0.0
  %1398 = vmatpush2.msra.mxu0 0.0
  %1399 = vmatprep.subr.mxu0 0.0
  %1400 = vmatpush2.msra.mxu0 0.0
  %1401 = vmatprep.subr.mxu0 0.0
  %1402 = vmatpush2.msra.mxu0 0.0
  %1403 = vmatprep.subr.mxu0 0.0
  %1404 = vmatpush2.msra.mxu0 0.0
  %1405 = vmatprep.subr.mxu0 0.0
  %1406 = vmatpush2.msra.mxu0 0.0
  %1407 = vmatprep.subr.mxu0 0.0
  %1408 = vmatpush2.msra.mxu0 0.0
  %1409 = vmatprep.subr.mxu0 0.0
  %1410 = vmatpush2.msra.mxu0 0.0
  %1411 = vmatprep.subr.mxu0 0.0
  %1412 = vmatpush2.msra.mxu0 0.0
  %1413 = vmatprep.subr.mxu0 0.0
  %1414 = vmatpush2.msra.mxu0 0.0
  %1415 = vmatprep.subr.mxu0 0.0
  %1416 = vmatpush2.msra.mxu0 0.0
  %1417 = vmatprep.subr.mxu0 0.0
  %1418 = vmatpush2.msra.mxu0 0.0
  %1419 = vmatprep.subr.mxu0 0.0
  %1420 = vmatpush2.msra.mxu0 0.0
  %1421 = vmatprep.subr.mxu0 0.0
  %1422 = vmatpush2.msra.mxu0 0.0
  %1423 = vmatprep.subr.mxu0 0.0
  %1424 = vmatpush2.msra.mxu0 0.0
  %1425 = vmatprep.subr.mxu0 0.0
  %1426 = vmatpush2.msra.mxu0 0.0
  %1427 = vmatprep.mubr.f32.mxu0 0.0
  %1428 = vmatmul.mubr.f32.gmra.mxu0 %v1359
  %v1429 = vpop.f32.mrf.mxu0
  %v1430 = vadd.f32 0.0, %v1429
  %v1431 = vpop.f32.mrf.mxu0
  %1432 = vmatprep.mubr.f32.mxu0 0.0
  %1433 = vmatmul.mubr.f32.gmra.mxu0 %v1360
  %v1434 = vpop.f32.mrf.mxu0
  %v1435 = vadd.f32 0.0, %v1434
  %v1436 = vpop.f32.mrf.mxu0
  %1437 = vmatprep.mubr.f32.mxu0 0.0
  %1438 = vmatmul.mubr.f32.gmra.mxu0 %v1361
  %v1439 = vpop.f32.mrf.mxu0
  %v1440 = vadd.f32 0.0, %v1439
  %v1441 = vpop.f32.mrf.mxu0
  %1442 = vmatprep.mubr.f32.mxu0 0.0
  %1443 = vmatmul.mubr.f32.gmra.mxu0 %v1362
  %v1444 = vpop.f32.mrf.mxu0
  %v1445 = vadd.f32 0.0, %v1444
  %v1446 = vpop.f32.mrf.mxu0
  %1447 = vdwg.mxu0
  %v1448 = vadd.f32 %v1430, %v1435
  %v1449 = vadd.f32 %v1448, %v1440
  %v1450 = vadd.f32 %v1449, %v1445
  %v1451 = vrot.slane %v1450, 4
  %v1452 = vadd.f32 %v1450, %v1451
  %v1453 = vrot.slane %v1452, 2
  %v1454 = vadd.f32 %v1452, %v1453
  %v1455 = vrot.slane %v1454, 1
  %v1456 = vadd.f32 %v1454, %v1455
  %v1457 = vmul.f32 %v1358, 0.001953125
  %v1458 = vmul.f32 %v1456, 0.001953125
  %v1459 = vmul.f32 %v1457, %v1457
  %v1460 = vsub.f32 %v1458, %v1459
  %v1461 = vmax.f32 %v1460, 0.0
  %v1462 = vadd.f32 %v1461, 1e-05
  %v1463 = vrsqrt.pop %v1462
  %v1464 = vmul.f32 %v1263, %v1463
  %v1465 = vmul.f32 %v1457, %v1464
  %v1466 = vsub.f32 %v1264, %v1465
  %v1468 = vlaneseq
  %v1469 = vshrl.u32 %v1468, 7
  %v1470 = vsub.s32 0, %v1469
  %v1471 = vrot.slane %v1464, %v1470
  %v1473 = vmul.f32 %v1259, %v1471
  %v1474 = vmul.f32 %v1260, %v1471
  %v1475 = vmul.f32 %v1261, %v1471
  %v1476 = vmul.f32 %v1262, %v1471
  %v1478 = vlaneseq
  %v1479 = vshrl.u32 %v1478, 7
  %v1480 = vsub.s32 0, %v1479
  %v1481 = vrot.slane %v1466, %v1480
  %v1483 = vadd.f32 %v1473, %v1481
  %v1484 = vadd.f32 %v1474, %v1481
  %v1485 = vadd.f32 %v1475, %v1481
  %v1486 = vadd.f32 %v1476, %v1481
  %v1487 = vmax.f32 %v1483, 0.0
  %v1488 = vmax.f32 %v1484, 0.0
  %v1489 = vmax.f32 %v1485, 0.0
  %v1490 = vmax.f32 %v1486, 0.0
  %1491 = vst [vmem:[%s10] sm:$0xff] %v1487
  %1492 = vst [vmem:[%s10 + $0x8] sm:$0xff] %v1488
  %1493 = vst [vmem:[%s10 + $0x10] sm:$0xff] %v1489
  %1494 = vst [vmem:[%s10 + $0x18] sm:$0xff] %v1490
  // Predicated region
  $region42: #{conv_block_forward.1} parent=0 // pred_check
    _
  $region43: #{conv_block_forward.1} parent=0 // pred_check_branch
    %1496 = sbr.rel (0) target = $region45
  $region44: #{conv_block_forward.1} parent=0 // pred_region
    _
  $region45: #{conv_block_forward.1} parent=0 // pred_fallthru
    _
  // Predicated region
  $region46: #{conv_block_forward.1} parent=0 // pred_check
    _
  $region47: #{conv_block_forward.1} parent=0 // pred_check_branch
    %1498 = sbr.rel (0) target = $region49
  $region48: #{conv_block_forward.1} parent=0 // pred_region
    _
  $region49: #{conv_block_forward.1} parent=0 // pred_fallthru
    _

</llo_original>
